<compile_context>
chip_gen: v7x
topology: tpu7x:2x2x1
jax: 0.10.0
libtpu: 0.0.40
codegen_flags: <defaults>
</compile_context>

<pallas_src>
import jax
import jax.numpy as jnp
from jax.experimental import pallas as pl
from jax.experimental.pallas import tpu as pltpu

# ---------------- problem sizes (small, consistent with the module) ----------------
N, CIN, H, W = 2, 4, 16, 16
COUT, KH, KW = 8, 3, 3
NUM_CLASSES = 10
HW = H * W                    # 256
P = N * HW                    # 512 (lane axis for the conv activation)
KPATCH = KH * KW * CIN        # 36
FEATS = COUT * HW             # 2048
BN_EPS = 1e-5


# ---------------- single fused kernel: conv + BN(train) + ReLU + linear ------------
def fused_kernel(patches_t_ref, wmat_t_ref, gamma_ref, beta_ref, wlin_ref, blin_ref,
                 out_ref):
    # patches_t_ref : (KPATCH, P)   rows = (kh,kw,cin), cols = (n,h,w)  [lane-dense]
    # wmat_t_ref    : (COUT, KPATCH)
    # gamma/beta    : (COUT, 1)
    # wlin_ref      : (COUT, HW, NUM_CLASSES)   wlin[c,p,o] = fc_w[o, c*HW + p]
    # blin_ref      : (1, NUM_CLASSES)
    # out_ref       : (N, NUM_CLASSES)

    # Conv as lane-dense im2col matmul: (8,36) @ (36,512) -> (8,512)
    y = jnp.dot(wmat_t_ref[...], patches_t_ref[...],
                preferred_element_type=jnp.float32)
    # NOTE: conv bias intentionally omitted — exactly cancelled by BN mean subtraction.

    # BatchNorm2d (training mode): per-channel batch mean / biased variance over all
    # N*H*W positions == the lane axis here.
    mean = jnp.mean(y, axis=1, keepdims=True)                       # (COUT, 1)
    var = jnp.mean((y - mean) * (y - mean), axis=1, keepdims=True)  # (COUT, 1)
    scale = gamma_ref[...] * jax.lax.rsqrt(var + BN_EPS)            # folded gamma*rsqrt
    z = jnp.maximum((y - mean) * scale + beta_ref[...], 0.0)        # (8, 512), ReLU

    # Linear over the NCHW flatten: logits[n,o] = sum_{c,p} z[c, n*HW+p] * wlin[c,p,o]
    # Static slices only (no in-kernel reshape/transpose); 16 tiny MXU matmuls.
    for n in range(N):
        acc = jnp.zeros((1, NUM_CLASSES), jnp.float32)
        for c in range(COUT):
            acc = acc + jnp.dot(z[c:c + 1, n * HW:(n + 1) * HW], wlin_ref[c],
                                preferred_element_type=jnp.float32)
        out_ref[n:n + 1, :] = acc + blin_ref[...]


def fused_forward(patches_t, wmat_t, gamma, beta, wlin, blin):
    return pl.pallas_call(
        fused_kernel,
        out_shape=jax.ShapeDtypeStruct((N, NUM_CLASSES), jnp.float32),
        grid_spec=pltpu.PrefetchScalarGridSpec(
            num_scalar_prefetch=0,
            grid=(1,),
            in_specs=[
                pl.BlockSpec((KPATCH, P), lambda i: (0, 0)),
                pl.BlockSpec((COUT, KPATCH), lambda i: (0, 0)),
                pl.BlockSpec((COUT, 1), lambda i: (0, 0)),
                pl.BlockSpec((COUT, 1), lambda i: (0, 0)),
                pl.BlockSpec((COUT, HW, NUM_CLASSES), lambda i: (0, 0, 0)),
                pl.BlockSpec((1, NUM_CLASSES), lambda i: (0, 0)),
            ],
            out_specs=pl.BlockSpec((N, NUM_CLASSES), lambda i: (0, 0)),
        ),
        compiler_params=pltpu.CompilerParams(dimension_semantics=("arbitrary",)),
    )(patches_t, wmat_t, gamma, beta, wlin, blin)


# ---------------- MetaMonkey-style functional forward ------------------------------
def meta_monkey_forward(x_nchw, params):
    """Functional forward of the patched net using externally supplied `params`."""
    conv_w = params["conv.weight"]       # (COUT, CIN, KH, KW)  -- PyTorch layout
    bn_g = params["bn.weight"]           # (COUT,)
    bn_b = params["bn.bias"]             # (COUT,)
    fc_w = params["fc.weight"]           # (NUM_CLASSES, FEATS) -- PyTorch layout
    fc_b = params["fc.bias"]             # (NUM_CLASSES,)
    # params["conv.bias"] is intentionally unused: cancelled by training-mode BN.

    # --- glue: transposed im2col built directly from NCHW (no NHWC activation transpose)
    xt = jnp.transpose(x_nchw, (1, 0, 2, 3))                    # (CIN, N, H, W)
    xp = jnp.pad(xt, ((0, 0), (0, 0), (1, 1), (1, 1)))          # pad=1 on spatial dims
    patches_t = jnp.concatenate(
        [xp[:, :, kh:kh + H, kw:kw + W].reshape(CIN, P)
         for kh in range(KH) for kw in range(KW)],
        axis=0)                                                 # (KPATCH, P)

    # conv weight (COUT,CIN,KH,KW) -> (COUT, KH,KW,CIN) -> (COUT, KPATCH) to match rows
    wmat_t = jnp.transpose(conv_w, (0, 2, 3, 1)).reshape(COUT, KPATCH)

    # linear weight rearranged (parameter side, hoistable): (O, C*HW) -> (C, HW, O)
    wlin = jnp.transpose(fc_w.reshape(NUM_CLASSES, COUT, HW), (1, 2, 0))

    return fused_forward(
        patches_t, wmat_t,
        bn_g.reshape(COUT, 1), bn_b.reshape(COUT, 1),
        wlin, fc_b.reshape(1, NUM_CLASSES),
    )


# ---------------- pure-JAX reference (same math incl. conv bias, no Pallas) --------
def reference_forward(x_nchw, params):
    conv_w, conv_b = params["conv.weight"], params["conv.bias"]
    bn_g, bn_b = params["bn.weight"], params["bn.bias"]
    fc_w, fc_b = params["fc.weight"], params["fc.bias"]

    y = jax.lax.conv_general_dilated(
        x_nchw, conv_w, window_strides=(1, 1), padding=((1, 1), (1, 1)),
        dimension_numbers=("NCHW", "OIHW", "NCHW"),
    ) + conv_b.reshape(1, COUT, 1, 1)
    mean = jnp.mean(y, axis=(0, 2, 3), keepdims=True)
    var = jnp.mean((y - mean) ** 2, axis=(0, 2, 3), keepdims=True)
    y = (y - mean) * jax.lax.rsqrt(var + BN_EPS) * bn_g.reshape(1, COUT, 1, 1) \
        + bn_b.reshape(1, COUT, 1, 1)
    y = jnp.maximum(y, 0.0)
    feat = y.reshape(N, FEATS)
    return feat @ fc_w.T + fc_b


# ---------------- main --------------------------------------------------------------
if __name__ == "__main__":
    key = jax.random.PRNGKey(0)
    ks = jax.random.split(key, 7)

    # deterministic synthetic parameters (shapes follow the PyTorch module __init__)
    params = {
        "conv.weight": 0.1 * jax.random.normal(ks[0], (COUT, CIN, KH, KW), jnp.float32),
        "conv.bias":   0.1 * jax.random.normal(ks[1], (COUT,), jnp.float32),
        "bn.weight":   1.0 + 0.1 * jax.random.normal(ks[2], (COUT,), jnp.float32),
        "bn.bias":     0.1 * jax.random.normal(ks[3], (COUT,), jnp.float32),
        "fc.weight":   0.05 * jax.random.normal(ks[4], (NUM_CLASSES, FEATS), jnp.float32),
        "fc.bias":     0.05 * jax.random.normal(ks[5], (NUM_CLASSES,), jnp.float32),
    }
    x = jax.random.normal(ks[6], (N, CIN, H, W), jnp.float32)    # NCHW, like PyTorch

    out = meta_monkey_forward(x, params)
    out = jax.block_until_ready(out)

    ref = jax.block_until_ready(reference_forward(x, params))
    assert out.shape == (N, NUM_CLASSES), out.shape
    assert jnp.allclose(out, ref, rtol=1e-3, atol=1e-3), (out, ref)

    print("KERNEL_OK")
</pallas_src>

<mosaic_0001>
module attributes {stable_mosaic.version = 11 : i64} {
  func.func @fused_kernel(%arg0: i32, %arg1: memref<36x512xf32, #tpu.memory_space<vmem>>, %arg2: memref<8x36xf32, #tpu.memory_space<vmem>>, %arg3: memref<8x1xf32, #tpu.memory_space<vmem>>, %arg4: memref<8x1xf32, #tpu.memory_space<vmem>>, %arg5: memref<8x256x10xf32, #tpu.memory_space<vmem>>, %arg6: memref<1x10xf32, #tpu.memory_space<vmem>>, %arg7: memref<2x10xf32, #tpu.memory_space<vmem>>) attributes {dimension_semantics = [#tpu.dimension_semantics<arbitrary>], iteration_bounds = array<i64: 1>, scalar_prefetch = 0 : i64, scratch_operands = 0 : i64, tpu.core_type = #tpu.core_type<tc>, window_params = [{pipeline_mode = #tpu.pipeline_mode<synchronous>, transform_indices = @transform_0, window_bounds = array<i64: 36, 512>}, {pipeline_mode = #tpu.pipeline_mode<synchronous>, transform_indices = @transform_1, window_bounds = array<i64: 8, 36>}, {pipeline_mode = #tpu.pipeline_mode<synchronous>, transform_indices = @transform_2, window_bounds = array<i64: 8, 1>}, {pipeline_mode = #tpu.pipeline_mode<synchronous>, transform_indices = @transform_3, window_bounds = array<i64: 8, 1>}, {pipeline_mode = #tpu.pipeline_mode<synchronous>, transform_indices = @transform_4, window_bounds = array<i64: 8, 256, 10>}, {pipeline_mode = #tpu.pipeline_mode<synchronous>, transform_indices = @transform_5, window_bounds = array<i64: 1, 10>}, {pipeline_mode = #tpu.pipeline_mode<synchronous>, transform_indices = @transform_6, window_bounds = array<i64: 2, 10>}]} {
    %c0 = arith.constant 0 : index
    %c0_0 = arith.constant 0 : index
    %0 = vector.load %arg2[%c0, %c0_0] : memref<8x36xf32, #tpu.memory_space<vmem>>, vector<8x36xf32>
    %c0_1 = arith.constant 0 : index
    %c0_2 = arith.constant 0 : index
    %1 = vector.load %arg1[%c0_1, %c0_2] : memref<36x512xf32, #tpu.memory_space<vmem>>, vector<36x512xf32>
    %cst = arith.constant dense<0.000000e+00> : vector<8x512xf32>
    %2 = tpu.matmul %0, %1, %cst {dimension_numbers = #tpu.dot_dimension_numbers<[1], [0], [0], [1], [0, 0, 1, 1], [], []>} : vector<8x36xf32>, vector<36x512xf32>, vector<8x512xf32> -> vector<8x512xf32>
    %cst_3 = arith.constant dense<0.000000e+00> : vector<8xf32>
    %3 = vector.multi_reduction <add>, %2, %cst_3 [1] : vector<8x512xf32> to vector<8xf32>
    %4 = vector.shape_cast %3 : vector<8xf32> to vector<8x1xf32>
    %cst_4 = arith.constant 5.120000e+02 : f32
    %5 = vector.broadcast %cst_4 : f32 to vector<8x1xf32>
    %6 = arith.divf %4, %5 : vector<8x1xf32>
    %7 = vector.broadcast %6 : vector<8x1xf32> to vector<8x512xf32>
    %8 = arith.subf %2, %7 : vector<8x512xf32>
    %9 = vector.broadcast %6 : vector<8x1xf32> to vector<8x512xf32>
    %10 = arith.subf %2, %9 : vector<8x512xf32>
    %11 = arith.mulf %8, %10 : vector<8x512xf32>
    %cst_5 = arith.constant dense<0.000000e+00> : vector<8xf32>
    %12 = vector.multi_reduction <add>, %11, %cst_5 [1] : vector<8x512xf32> to vector<8xf32>
    %13 = vector.shape_cast %12 : vector<8xf32> to vector<8x1xf32>
    %cst_6 = arith.constant 5.120000e+02 : f32
    %14 = vector.broadcast %cst_6 : f32 to vector<8x1xf32>
    %15 = arith.divf %13, %14 : vector<8x1xf32>
    %c0_7 = arith.constant 0 : index
    %c0_8 = arith.constant 0 : index
    %16 = vector.load %arg3[%c0_7, %c0_8] : memref<8x1xf32, #tpu.memory_space<vmem>>, vector<8x1xf32>
    %cst_9 = arith.constant 9.99999974E-6 : f32
    %17 = vector.broadcast %cst_9 : f32 to vector<8x1xf32>
    %18 = arith.addf %15, %17 : vector<8x1xf32>
    %19 = math.rsqrt %18 : vector<8x1xf32>
    %20 = arith.mulf %16, %19 : vector<8x1xf32>
    %21 = vector.broadcast %6 : vector<8x1xf32> to vector<8x512xf32>
    %22 = arith.subf %2, %21 : vector<8x512xf32>
    %23 = vector.broadcast %20 : vector<8x1xf32> to vector<8x512xf32>
    %24 = arith.mulf %22, %23 : vector<8x512xf32>
    %c0_10 = arith.constant 0 : index
    %c0_11 = arith.constant 0 : index
    %25 = vector.load %arg4[%c0_10, %c0_11] : memref<8x1xf32, #tpu.memory_space<vmem>>, vector<8x1xf32>
    %26 = vector.broadcast %25 : vector<8x1xf32> to vector<8x512xf32>
    %27 = arith.addf %24, %26 : vector<8x512xf32>
    %cst_12 = arith.constant 0.000000e+00 : f32
    %28 = vector.broadcast %cst_12 : f32 to vector<8x512xf32>
    %29 = arith.maximumf %27, %28 : vector<8x512xf32>
    %cst_13 = arith.constant 0.000000e+00 : f32
    %30 = vector.broadcast %cst_13 : f32 to vector<1x10xf32>
    %31 = vector.extract_strided_slice %29 {offsets = [0, 0], sizes = [1, 256], strides = [1, 1]} : vector<8x512xf32> to vector<1x256xf32>
    %c0_14 = arith.constant 0 : index
    %c0_15 = arith.constant 0 : index
    %c0_16 = arith.constant 0 : index
    %32 = vector.load %arg5[%c0_14, %c0_15, %c0_16] : memref<8x256x10xf32, #tpu.memory_space<vmem>>, vector<1x256x10xf32>
    %33 = vector.shape_cast %32 : vector<1x256x10xf32> to vector<256x10xf32>
    %cst_17 = arith.constant dense<0.000000e+00> : vector<1x10xf32>
    %34 = tpu.matmul %31, %33, %cst_17 {dimension_numbers = #tpu.dot_dimension_numbers<[1], [0], [0], [1], [0, 0, 1, 1], [], []>} : vector<1x256xf32>, vector<256x10xf32>, vector<1x10xf32> -> vector<1x10xf32>
    %35 = arith.addf %30, %34 : vector<1x10xf32>
    %36 = vector.extract_strided_slice %29 {offsets = [1, 0], sizes = [1, 256], strides = [1, 1]} : vector<8x512xf32> to vector<1x256xf32>
    %c1 = arith.constant 1 : index
    %c0_18 = arith.constant 0 : index
    %c0_19 = arith.constant 0 : index
    %37 = vector.load %arg5[%c1, %c0_18, %c0_19] : memref<8x256x10xf32, #tpu.memory_space<vmem>>, vector<1x256x10xf32>
    %38 = vector.shape_cast %37 : vector<1x256x10xf32> to vector<256x10xf32>
    %cst_20 = arith.constant dense<0.000000e+00> : vector<1x10xf32>
    %39 = tpu.matmul %36, %38, %cst_20 {dimension_numbers = #tpu.dot_dimension_numbers<[1], [0], [0], [1], [0, 0, 1, 1], [], []>} : vector<1x256xf32>, vector<256x10xf32>, vector<1x10xf32> -> vector<1x10xf32>
    %40 = arith.addf %35, %39 : vector<1x10xf32>
    %41 = vector.extract_strided_slice %29 {offsets = [2, 0], sizes = [1, 256], strides = [1, 1]} : vector<8x512xf32> to vector<1x256xf32>
    %c2 = arith.constant 2 : index
    %c0_21 = arith.constant 0 : index
    %c0_22 = arith.constant 0 : index
    %42 = vector.load %arg5[%c2, %c0_21, %c0_22] : memref<8x256x10xf32, #tpu.memory_space<vmem>>, vector<1x256x10xf32>
    %43 = vector.shape_cast %42 : vector<1x256x10xf32> to vector<256x10xf32>
    %cst_23 = arith.constant dense<0.000000e+00> : vector<1x10xf32>
    %44 = tpu.matmul %41, %43, %cst_23 {dimension_numbers = #tpu.dot_dimension_numbers<[1], [0], [0], [1], [0, 0, 1, 1], [], []>} : vector<1x256xf32>, vector<256x10xf32>, vector<1x10xf32> -> vector<1x10xf32>
    %45 = arith.addf %40, %44 : vector<1x10xf32>
    %46 = vector.extract_strided_slice %29 {offsets = [3, 0], sizes = [1, 256], strides = [1, 1]} : vector<8x512xf32> to vector<1x256xf32>
    %c3 = arith.constant 3 : index
    %c0_24 = arith.constant 0 : index
    %c0_25 = arith.constant 0 : index
    %47 = vector.load %arg5[%c3, %c0_24, %c0_25] : memref<8x256x10xf32, #tpu.memory_space<vmem>>, vector<1x256x10xf32>
    %48 = vector.shape_cast %47 : vector<1x256x10xf32> to vector<256x10xf32>
    %cst_26 = arith.constant dense<0.000000e+00> : vector<1x10xf32>
    %49 = tpu.matmul %46, %48, %cst_26 {dimension_numbers = #tpu.dot_dimension_numbers<[1], [0], [0], [1], [0, 0, 1, 1], [], []>} : vector<1x256xf32>, vector<256x10xf32>, vector<1x10xf32> -> vector<1x10xf32>
    %50 = arith.addf %45, %49 : vector<1x10xf32>
    %51 = vector.extract_strided_slice %29 {offsets = [4, 0], sizes = [1, 256], strides = [1, 1]} : vector<8x512xf32> to vector<1x256xf32>
    %c4 = arith.constant 4 : index
    %c0_27 = arith.constant 0 : index
    %c0_28 = arith.constant 0 : index
    %52 = vector.load %arg5[%c4, %c0_27, %c0_28] : memref<8x256x10xf32, #tpu.memory_space<vmem>>, vector<1x256x10xf32>
    %53 = vector.shape_cast %52 : vector<1x256x10xf32> to vector<256x10xf32>
    %cst_29 = arith.constant dense<0.000000e+00> : vector<1x10xf32>
    %54 = tpu.matmul %51, %53, %cst_29 {dimension_numbers = #tpu.dot_dimension_numbers<[1], [0], [0], [1], [0, 0, 1, 1], [], []>} : vector<1x256xf32>, vector<256x10xf32>, vector<1x10xf32> -> vector<1x10xf32>
    %55 = arith.addf %50, %54 : vector<1x10xf32>
    %56 = vector.extract_strided_slice %29 {offsets = [5, 0], sizes = [1, 256], strides = [1, 1]} : vector<8x512xf32> to vector<1x256xf32>
    %c5 = arith.constant 5 : index
    %c0_30 = arith.constant 0 : index
    %c0_31 = arith.constant 0 : index
    %57 = vector.load %arg5[%c5, %c0_30, %c0_31] : memref<8x256x10xf32, #tpu.memory_space<vmem>>, vector<1x256x10xf32>
    %58 = vector.shape_cast %57 : vector<1x256x10xf32> to vector<256x10xf32>
    %cst_32 = arith.constant dense<0.000000e+00> : vector<1x10xf32>
    %59 = tpu.matmul %56, %58, %cst_32 {dimension_numbers = #tpu.dot_dimension_numbers<[1], [0], [0], [1], [0, 0, 1, 1], [], []>} : vector<1x256xf32>, vector<256x10xf32>, vector<1x10xf32> -> vector<1x10xf32>
    %60 = arith.addf %55, %59 : vector<1x10xf32>
    %61 = vector.extract_strided_slice %29 {offsets = [6, 0], sizes = [1, 256], strides = [1, 1]} : vector<8x512xf32> to vector<1x256xf32>
    %c6 = arith.constant 6 : index
    %c0_33 = arith.constant 0 : index
    %c0_34 = arith.constant 0 : index
    %62 = vector.load %arg5[%c6, %c0_33, %c0_34] : memref<8x256x10xf32, #tpu.memory_space<vmem>>, vector<1x256x10xf32>
    %63 = vector.shape_cast %62 : vector<1x256x10xf32> to vector<256x10xf32>
    %cst_35 = arith.constant dense<0.000000e+00> : vector<1x10xf32>
    %64 = tpu.matmul %61, %63, %cst_35 {dimension_numbers = #tpu.dot_dimension_numbers<[1], [0], [0], [1], [0, 0, 1, 1], [], []>} : vector<1x256xf32>, vector<256x10xf32>, vector<1x10xf32> -> vector<1x10xf32>
    %65 = arith.addf %60, %64 : vector<1x10xf32>
    %66 = vector.extract_strided_slice %29 {offsets = [7, 0], sizes = [1, 256], strides = [1, 1]} : vector<8x512xf32> to vector<1x256xf32>
    %c7 = arith.constant 7 : index
    %c0_36 = arith.constant 0 : index
    %c0_37 = arith.constant 0 : index
    %67 = vector.load %arg5[%c7, %c0_36, %c0_37] : memref<8x256x10xf32, #tpu.memory_space<vmem>>, vector<1x256x10xf32>
    %68 = vector.shape_cast %67 : vector<1x256x10xf32> to vector<256x10xf32>
    %cst_38 = arith.constant dense<0.000000e+00> : vector<1x10xf32>
    %69 = tpu.matmul %66, %68, %cst_38 {dimension_numbers = #tpu.dot_dimension_numbers<[1], [0], [0], [1], [0, 0, 1, 1], [], []>} : vector<1x256xf32>, vector<256x10xf32>, vector<1x10xf32> -> vector<1x10xf32>
    %70 = arith.addf %65, %69 : vector<1x10xf32>
    %c0_39 = arith.constant 0 : index
    %c0_40 = arith.constant 0 : index
    %71 = vector.load %arg6[%c0_39, %c0_40] : memref<1x10xf32, #tpu.memory_space<vmem>>, vector<1x10xf32>
    %72 = arith.addf %70, %71 : vector<1x10xf32>
    %c0_41 = arith.constant 0 : index
    %c0_42 = arith.constant 0 : index
    %73 = vector.load %arg7[%c0_41, %c0_42] : memref<2x10xf32, #tpu.memory_space<vmem>>, vector<1x10xf32>
    tpu.vector_store %arg7[%c0_41, %c0_42], %72 {strides = array<i32>} : memref<2x10xf32, #tpu.memory_space<vmem>>, vector<1x10xf32>,
    %cst_43 = arith.constant 0.000000e+00 : f32
    %74 = vector.broadcast %cst_43 : f32 to vector<1x10xf32>
    %75 = vector.extract_strided_slice %29 {offsets = [0, 256], sizes = [1, 256], strides = [1, 1]} : vector<8x512xf32> to vector<1x256xf32>
    %c0_44 = arith.constant 0 : index
    %c0_45 = arith.constant 0 : index
    %c0_46 = arith.constant 0 : index
    %76 = vector.load %arg5[%c0_44, %c0_45, %c0_46] : memref<8x256x10xf32, #tpu.memory_space<vmem>>, vector<1x256x10xf32>
    %77 = vector.shape_cast %76 : vector<1x256x10xf32> to vector<256x10xf32>
    %cst_47 = arith.constant dense<0.000000e+00> : vector<1x10xf32>
    %78 = tpu.matmul %75, %77, %cst_47 {dimension_numbers = #tpu.dot_dimension_numbers<[1], [0], [0], [1], [0, 0, 1, 1], [], []>} : vector<1x256xf32>, vector<256x10xf32>, vector<1x10xf32> -> vector<1x10xf32>
    %79 = arith.addf %74, %78 : vector<1x10xf32>
    %80 = vector.extract_strided_slice %29 {offsets = [1, 256], sizes = [1, 256], strides = [1, 1]} : vector<8x512xf32> to vector<1x256xf32>
    %c1_48 = arith.constant 1 : index
    %c0_49 = arith.constant 0 : index
    %c0_50 = arith.constant 0 : index
    %81 = vector.load %arg5[%c1_48, %c0_49, %c0_50] : memref<8x256x10xf32, #tpu.memory_space<vmem>>, vector<1x256x10xf32>
    %82 = vector.shape_cast %81 : vector<1x256x10xf32> to vector<256x10xf32>
    %cst_51 = arith.constant dense<0.000000e+00> : vector<1x10xf32>
    %83 = tpu.matmul %80, %82, %cst_51 {dimension_numbers = #tpu.dot_dimension_numbers<[1], [0], [0], [1], [0, 0, 1, 1], [], []>} : vector<1x256xf32>, vector<256x10xf32>, vector<1x10xf32> -> vector<1x10xf32>
    %84 = arith.addf %79, %83 : vector<1x10xf32>
    %85 = vector.extract_strided_slice %29 {offsets = [2, 256], sizes = [1, 256], strides = [1, 1]} : vector<8x512xf32> to vector<1x256xf32>
    %c2_52 = arith.constant 2 : index
    %c0_53 = arith.constant 0 : index
    %c0_54 = arith.constant 0 : index
    %86 = vector.load %arg5[%c2_52, %c0_53, %c0_54] : memref<8x256x10xf32, #tpu.memory_space<vmem>>, vector<1x256x10xf32>
    %87 = vector.shape_cast %86 : vector<1x256x10xf32> to vector<256x10xf32>
    %cst_55 = arith.constant dense<0.000000e+00> : vector<1x10xf32>
    %88 = tpu.matmul %85, %87, %cst_55 {dimension_numbers = #tpu.dot_dimension_numbers<[1], [0], [0], [1], [0, 0, 1, 1], [], []>} : vector<1x256xf32>, vector<256x10xf32>, vector<1x10xf32> -> vector<1x10xf32>
    %89 = arith.addf %84, %88 : vector<1x10xf32>
    %90 = vector.extract_strided_slice %29 {offsets = [3, 256], sizes = [1, 256], strides = [1, 1]} : vector<8x512xf32> to vector<1x256xf32>
    %c3_56 = arith.constant 3 : index
    %c0_57 = arith.constant 0 : index
    %c0_58 = arith.constant 0 : index
    %91 = vector.load %arg5[%c3_56, %c0_57, %c0_58] : memref<8x256x10xf32, #tpu.memory_space<vmem>>, vector<1x256x10xf32>
    %92 = vector.shape_cast %91 : vector<1x256x10xf32> to vector<256x10xf32>
    %cst_59 = arith.constant dense<0.000000e+00> : vector<1x10xf32>
    %93 = tpu.matmul %90, %92, %cst_59 {dimension_numbers = #tpu.dot_dimension_numbers<[1], [0], [0], [1], [0, 0, 1, 1], [], []>} : vector<1x256xf32>, vector<256x10xf32>, vector<1x10xf32> -> vector<1x10xf32>
    %94 = arith.addf %89, %93 : vector<1x10xf32>
    %95 = vector.extract_strided_slice %29 {offsets = [4, 256], sizes = [1, 256], strides = [1, 1]} : vector<8x512xf32> to vector<1x256xf32>
    %c4_60 = arith.constant 4 : index
    %c0_61 = arith.constant 0 : index
    %c0_62 = arith.constant 0 : index
    %96 = vector.load %arg5[%c4_60, %c0_61, %c0_62] : memref<8x256x10xf32, #tpu.memory_space<vmem>>, vector<1x256x10xf32>
    %97 = vector.shape_cast %96 : vector<1x256x10xf32> to vector<256x10xf32>
    %cst_63 = arith.constant dense<0.000000e+00> : vector<1x10xf32>
    %98 = tpu.matmul %95, %97, %cst_63 {dimension_numbers = #tpu.dot_dimension_numbers<[1], [0], [0], [1], [0, 0, 1, 1], [], []>} : vector<1x256xf32>, vector<256x10xf32>, vector<1x10xf32> -> vector<1x10xf32>
    %99 = arith.addf %94, %98 : vector<1x10xf32>
    %100 = vector.extract_strided_slice %29 {offsets = [5, 256], sizes = [1, 256], strides = [1, 1]} : vector<8x512xf32> to vector<1x256xf32>
    %c5_64 = arith.constant 5 : index
    %c0_65 = arith.constant 0 : index
    %c0_66 = arith.constant 0 : index
    %101 = vector.load %arg5[%c5_64, %c0_65, %c0_66] : memref<8x256x10xf32, #tpu.memory_space<vmem>>, vector<1x256x10xf32>
    %102 = vector.shape_cast %101 : vector<1x256x10xf32> to vector<256x10xf32>
    %cst_67 = arith.constant dense<0.000000e+00> : vector<1x10xf32>
    %103 = tpu.matmul %100, %102, %cst_67 {dimension_numbers = #tpu.dot_dimension_numbers<[1], [0], [0], [1], [0, 0, 1, 1], [], []>} : vector<1x256xf32>, vector<256x10xf32>, vector<1x10xf32> -> vector<1x10xf32>
    %104 = arith.addf %99, %103 : vector<1x10xf32>
    %105 = vector.extract_strided_slice %29 {offsets = [6, 256], sizes = [1, 256], strides = [1, 1]} : vector<8x512xf32> to vector<1x256xf32>
    %c6_68 = arith.constant 6 : index
    %c0_69 = arith.constant 0 : index
    %c0_70 = arith.constant 0 : index
    %106 = vector.load %arg5[%c6_68, %c0_69, %c0_70] : memref<8x256x10xf32, #tpu.memory_space<vmem>>, vector<1x256x10xf32>
    %107 = vector.shape_cast %106 : vector<1x256x10xf32> to vector<256x10xf32>
    %cst_71 = arith.constant dense<0.000000e+00> : vector<1x10xf32>
    %108 = tpu.matmul %105, %107, %cst_71 {dimension_numbers = #tpu.dot_dimension_numbers<[1], [0], [0], [1], [0, 0, 1, 1], [], []>} : vector<1x256xf32>, vector<256x10xf32>, vector<1x10xf32> -> vector<1x10xf32>
    %109 = arith.addf %104, %108 : vector<1x10xf32>
    %110 = vector.extract_strided_slice %29 {offsets = [7, 256], sizes = [1, 256], strides = [1, 1]} : vector<8x512xf32> to vector<1x256xf32>
    %c7_72 = arith.constant 7 : index
    %c0_73 = arith.constant 0 : index
    %c0_74 = arith.constant 0 : index
    %111 = vector.load %arg5[%c7_72, %c0_73, %c0_74] : memref<8x256x10xf32, #tpu.memory_space<vmem>>, vector<1x256x10xf32>
    %112 = vector.shape_cast %111 : vector<1x256x10xf32> to vector<256x10xf32>
    %cst_75 = arith.constant dense<0.000000e+00> : vector<1x10xf32>
    %113 = tpu.matmul %110, %112, %cst_75 {dimension_numbers = #tpu.dot_dimension_numbers<[1], [0], [0], [1], [0, 0, 1, 1], [], []>} : vector<1x256xf32>, vector<256x10xf32>, vector<1x10xf32> -> vector<1x10xf32>
    %114 = arith.addf %109, %113 : vector<1x10xf32>
    %c0_76 = arith.constant 0 : index
    %c0_77 = arith.constant 0 : index
    %115 = vector.load %arg6[%c0_76, %c0_77] : memref<1x10xf32, #tpu.memory_space<vmem>>, vector<1x10xf32>
    %116 = arith.addf %114, %115 : vector<1x10xf32>
    %c1_78 = arith.constant 1 : index
    %c0_79 = arith.constant 0 : index
    %117 = vector.load %arg7[%c1_78, %c0_79] : memref<2x10xf32, #tpu.memory_space<vmem>>, vector<1x10xf32>
    tpu.vector_store %arg7[%c1_78, %c0_79], %116 {strides = array<i32>} : memref<2x10xf32, #tpu.memory_space<vmem>>, vector<1x10xf32>,
    return
  }
  func.func @transform_0(%arg0: i32) -> (i32, i32) {
    %c0_i32 = arith.constant 0 : i32
    %c0_i32_0 = arith.constant 0 : i32
    %c0_i32_1 = arith.constant 0 : i32
    return %c0_i32, %c0_i32_0 : i32, i32
  }
  func.func @transform_1(%arg0: i32) -> (i32, i32) {
    %c0_i32 = arith.constant 0 : i32
    %c0_i32_0 = arith.constant 0 : i32
    %c0_i32_1 = arith.constant 0 : i32
    return %c0_i32, %c0_i32_0 : i32, i32
  }
  func.func @transform_2(%arg0: i32) -> (i32, i32) {
    %c0_i32 = arith.constant 0 : i32
    %c0_i32_0 = arith.constant 0 : i32
    %c0_i32_1 = arith.constant 0 : i32
    return %c0_i32, %c0_i32_0 : i32, i32
  }
  func.func @transform_3(%arg0: i32) -> (i32, i32) {
    %c0_i32 = arith.constant 0 : i32
    %c0_i32_0 = arith.constant 0 : i32
    %c0_i32_1 = arith.constant 0 : i32
    return %c0_i32, %c0_i32_0 : i32, i32
  }
  func.func @transform_4(%arg0: i32) -> (i32, i32, i32) {
    %c0_i32 = arith.constant 0 : i32
    %c0_i32_0 = arith.constant 0 : i32
    %c0_i32_1 = arith.constant 0 : i32
    %c0_i32_2 = arith.constant 0 : i32
    return %c0_i32, %c0_i32_0, %c0_i32_1 : i32, i32, i32
  }
  func.func @transform_5(%arg0: i32) -> (i32, i32) {
    %c0_i32 = arith.constant 0 : i32
    %c0_i32_0 = arith.constant 0 : i32
    %c0_i32_1 = arith.constant 0 : i32
    return %c0_i32, %c0_i32_0 : i32, i32
  }
  func.func @transform_6(%arg0: i32) -> (i32, i32) {
    %c0_i32 = arith.constant 0 : i32
    %c0_i32_0 = arith.constant 0 : i32
    %c0_i32_1 = arith.constant 0 : i32
    return %c0_i32, %c0_i32_0 : i32, i32
  }
}

</mosaic_0001>

<llo_original>
// kernel: tpu_custom_call.1
$region0: #{tpu_custom_call.1}
  #allocation0 [shape = 'u32[]', space=smem, size = 0x4, offset = 0x4, fixed_abs, tag = 'smem constant byte address 0x4 - core index']
  #allocation1 [shape = 'u32[144,128]{1,0:T(1,128)}', space=vmem, size = 0x12000, scoped, tag = 'internal scratch']
  %s0 = inlined_call_operand.vmem [shape: f32[36,512], index: 0, kind: input, shape index: {}]
  %s1 = inlined_call_operand.vmem [shape: f32[8,36], index: 1, kind: input, shape index: {}]
  %s2 = inlined_call_operand.vmem [shape: f32[8,1], index: 2, kind: input, shape index: {}]
  %s3 = inlined_call_operand.vmem [shape: f32[8,1], index: 3, kind: input, shape index: {}]
  %s4 = inlined_call_operand.vmem [shape: f32[8,256,10], index: 4, kind: input, shape index: {}]
  %s5 = inlined_call_operand.vmem [shape: f32[1,10], index: 5, kind: input, shape index: {}]
  %s6 = inlined_call_operand.hbm [shape: f32[2,10], index: 6, kind: output, shape index: {}]
  %s7 = sld [smem:[#allocation0]]
  $region34: #{tpu_custom_call.1} parent=0
    _
  %s9 = ssub.s32 1, %s7
  %s10 = scalar_select 0, %s9, %s7
  $region1: #{tpu_custom_call.1} parent=0
    #allocation2 [shape = 'u8[1024]{0}', space=vmem, size = 0x400, scoped, tag = 'output window, operand 0, single buffered']
    #allocation3 [shape = 's32[1]{0}', space=sflag, size = 0x4, scoped, tag = 'scoped memory for tpu_custom_call.1']
    %11 = vsyncpa [#allocation3], 0
    // Predicated region
    $region2: #{tpu_custom_call.1} parent=1 // pred_check
      _
    $region3: #{tpu_custom_call.1} parent=1 // pred_check_branch
      %13 = sbr.rel (0) target = $region5
    $region4: #{tpu_custom_call.1} parent=1 // pred_region
      _
    $region5: #{tpu_custom_call.1} parent=1 // pred_fallthru
      _
    // Predicated region
    $region6: #{tpu_custom_call.1} parent=1 // pred_check
      _
    $region7: #{tpu_custom_call.1} parent=1 // pred_check_branch
      %15 = sbr.rel (0) target = $region9
    $region8: #{tpu_custom_call.1} parent=1 // pred_region
      _
    $region9: #{tpu_custom_call.1} parent=1 // pred_fallthru
      _
    // Predicated region
    $region10: #{tpu_custom_call.1} parent=1 // pred_check
      _
    $region11: #{tpu_custom_call.1} parent=1 // pred_check_branch
      %17 = sbr.rel (0) target = $region13
    $region12: #{tpu_custom_call.1} parent=1 // pred_region
      _
    $region13: #{tpu_custom_call.1} parent=1 // pred_fallthru
      _
    // Predicated region
    $region14: #{tpu_custom_call.1} parent=1 // pred_check
      _
    $region15: #{tpu_custom_call.1} parent=1 // pred_check_branch
      %19 = sbr.rel (0) target = $region17
    $region16: #{tpu_custom_call.1} parent=1 // pred_region
      _
    $region17: #{tpu_custom_call.1} parent=1 // pred_fallthru
      _
    // Predicated region
    $region18: #{tpu_custom_call.1} parent=1 // pred_check
      _
    $region19: #{tpu_custom_call.1} parent=1 // pred_check_branch
      %21 = sbr.rel (0) target = $region21
    $region20: #{tpu_custom_call.1} parent=1 // pred_region
      _
    $region21: #{tpu_custom_call.1} parent=1 // pred_fallthru
      _
    // Predicated region
    $region22: #{tpu_custom_call.1} parent=1 // pred_check
      _
    $region23: #{tpu_custom_call.1} parent=1 // pred_check_branch
      %23 = sbr.rel (0) target = $region25
    $region24: #{tpu_custom_call.1} parent=1 // pred_region
      _
    $region25: #{tpu_custom_call.1} parent=1 // pred_fallthru
      _
    %v24 = vld [vmem:[%s1] sm:$0xff]
    %v25 = vld [vmem:[%s0] sm:$0xff]
    %v26 = vld [vmem:[%s0 + $0x8] sm:$0xff]
    %v27 = vld [vmem:[%s0 + $0x10] sm:$0xff]
    %v28 = vld [vmem:[%s0 + $0x18] sm:$0xff]
    %v29 = vld [vmem:[%s0 + $0x20] sm:$0xff]
    %v30 = vld [vmem:[%s0 + $0x28] sm:$0xff]
    %v31 = vld [vmem:[%s0 + $0x30] sm:$0xff]
    %v32 = vld [vmem:[%s0 + $0x38] sm:$0xff]
    %v33 = vld [vmem:[%s0 + $0x40] sm:$0xff]
    %v34 = vld [vmem:[%s0 + $0x48] sm:$0xff]
    %v35 = vld [vmem:[%s0 + $0x50] sm:$0xff]
    %v36 = vld [vmem:[%s0 + $0x58] sm:$0xff]
    %v37 = vld [vmem:[%s0 + $0x60] sm:$0xff]
    %v38 = vld [vmem:[%s0 + $0x68] sm:$0xff]
    %v39 = vld [vmem:[%s0 + $0x70] sm:$0xff]
    %v40 = vld [vmem:[%s0 + $0x78] sm:$0xff]
    %v41 = vld [vmem:[%s0 + $0x80] sm:$0xf]
    %v42 = vld [vmem:[%s0 + $0x88] sm:$0xf]
    %v43 = vld [vmem:[%s0 + $0x90] sm:$0xf]
    %v44 = vld [vmem:[%s0 + $0x98] sm:$0xf]
    %vm45 = vcmask 293888
    %v47 = vsel %vm45, %v24, 0
    %vm49 = vcmask 1043456
    %v51 = vsel %vm49, %v41, 0
    %v54 = vsel %vm49, %v42, 0
    %v57 = vsel %vm49, %v43, 0
    %v60 = vsel %vm49, %v44, 0
    %62 = vmatprep.subr.mxu0 %v26
    %63 = vmatpush1.msra.mxu0 %v25
    %64 = vmatprep.subr.mxu0 %v30
    %65 = vmatpush1.msra.mxu0 %v29
    %66 = vmatprep.subr.mxu0 %v34
    %67 = vmatpush1.msra.mxu0 %v33
    %68 = vmatprep.subr.mxu0 %v38
    %69 = vmatpush1.msra.mxu0 %v37
    %70 = vmatprep.subr.mxu0 %v54
    %71 = vmatpush1.msra.mxu0 %v51
    %72 = vmatprep.subr.mxu0 0.0
    %73 = vmatpush1.msra.mxu0 0.0
    %74 = vmatprep.subr.mxu0 0.0
    %75 = vmatpush1.msra.mxu0 0.0
    %76 = vmatprep.subr.mxu0 0.0
    %77 = vmatpush1.msra.mxu0 0.0
    %78 = vmatprep.subr.mxu0 0.0
    %79 = vmatpush1.msra.mxu0 0.0
    %80 = vmatprep.subr.mxu0 0.0
    %81 = vmatpush1.msra.mxu0 0.0
    %82 = vmatprep.subr.mxu0 0.0
    %83 = vmatpush1.msra.mxu0 0.0
    %84 = vmatprep.subr.mxu0 0.0
    %85 = vmatpush1.msra.mxu0 0.0
    %86 = vmatprep.subr.mxu0 0.0
    %87 = vmatpush1.msra.mxu0 0.0
    %88 = vmatprep.subr.mxu0 0.0
    %89 = vmatpush1.msra.mxu0 0.0
    %90 = vmatprep.subr.mxu0 0.0
    %91 = vmatpush1.msra.mxu0 0.0
    %92 = vmatprep.subr.mxu0 0.0
    %93 = vmatpush1.msra.mxu0 0.0
    %94 = vmatprep.subr.mxu0 0.0
    %95 = vmatpush1.msra.mxu0 0.0
    %96 = vmatprep.subr.mxu0 0.0
    %97 = vmatpush1.msra.mxu0 0.0
    %98 = vmatprep.subr.mxu0 0.0
    %99 = vmatpush1.msra.mxu0 0.0
    %100 = vmatprep.subr.mxu0 0.0
    %101 = vmatpush1.msra.mxu0 0.0
    %102 = vmatprep.subr.mxu0 0.0
    %103 = vmatpush1.msra.mxu0 0.0
    %104 = vmatprep.subr.mxu0 0.0
    %105 = vmatpush1.msra.mxu0 0.0
    %106 = vmatprep.subr.mxu0 0.0
    %107 = vmatpush1.msra.mxu0 0.0
    %108 = vmatprep.subr.mxu0 0.0
    %109 = vmatpush1.msra.mxu0 0.0
    %110 = vmatprep.subr.mxu0 0.0
    %111 = vmatpush1.msra.mxu0 0.0
    %112 = vmatprep.subr.mxu0 0.0
    %113 = vmatpush1.msra.mxu0 0.0
    %114 = vmatprep.subr.mxu0 0.0
    %115 = vmatpush1.msra.mxu0 0.0
    %116 = vmatprep.subr.mxu0 0.0
    %117 = vmatpush1.msra.mxu0 0.0
    %118 = vmatprep.subr.mxu0 0.0
    %119 = vmatpush1.msra.mxu0 0.0
    %120 = vmatprep.subr.mxu0 0.0
    %121 = vmatpush1.msra.mxu0 0.0
    %122 = vmatprep.subr.mxu0 0.0
    %123 = vmatpush1.msra.mxu0 0.0
    %124 = vmatprep.subr.mxu0 0.0
    %125 = vmatpush1.msra.mxu0 0.0
    %126 = vmatprep.mubr.f32.mxu0 0.0
    %127 = vmatmul.mubr.f32.gmra.mrb[0].mxu0 %v47
    %v128 = vpop.f32.mrb[0].mxu0
    %v129 = vadd.f32 0.0, %v128
    %v130 = vpop.f32.mrb[0].mxu0
    %v131 = vadd.f32 0.0, %v130
    %132 = vdwg.mxu0
    %133 = vmatprep.subr.mxu0 %v28
    %134 = vmatpush1.msra.mxu0 %v27
    %135 = vmatprep.subr.mxu0 %v32
    %136 = vmatpush1.msra.mxu0 %v31
    %137 = vmatprep.subr.mxu0 %v36
    %138 = vmatpush1.msra.mxu0 %v35
    %139 = vmatprep.subr.mxu0 %v40
    %140 = vmatpush1.msra.mxu0 %v39
    %141 = vmatprep.subr.mxu0 %v60
    %142 = vmatpush1.msra.mxu0 %v57
    %143 = vmatprep.subr.mxu0 0.0
    %144 = vmatpush1.msra.mxu0 0.0
    %145 = vmatprep.subr.mxu0 0.0
    %146 = vmatpush1.msra.mxu0 0.0
    %147 = vmatprep.subr.mxu0 0.0
    %148 = vmatpush1.msra.mxu0 0.0
    %149 = vmatprep.subr.mxu0 0.0
    %150 = vmatpush1.msra.mxu0 0.0
    %151 = vmatprep.subr.mxu0 0.0
    %152 = vmatpush1.msra.mxu0 0.0
    %153 = vmatprep.subr.mxu0 0.0
    %154 = vmatpush1.msra.mxu0 0.0
    %155 = vmatprep.subr.mxu0 0.0
    %156 = vmatpush1.msra.mxu0 0.0
    %157 = vmatprep.subr.mxu0 0.0
    %158 = vmatpush1.msra.mxu0 0.0
    %159 = vmatprep.subr.mxu0 0.0
    %160 = vmatpush1.msra.mxu0 0.0
    %161 = vmatprep.subr.mxu0 0.0
    %162 = vmatpush1.msra.mxu0 0.0
    %163 = vmatprep.subr.mxu0 0.0
    %164 = vmatpush1.msra.mxu0 0.0
    %165 = vmatprep.subr.mxu0 0.0
    %166 = vmatpush1.msra.mxu0 0.0
    %167 = vmatprep.subr.mxu0 0.0
    %168 = vmatpush1.msra.mxu0 0.0
    %169 = vmatprep.subr.mxu0 0.0
    %170 = vmatpush1.msra.mxu0 0.0
    %171 = vmatprep.subr.mxu0 0.0
    %172 = vmatpush1.msra.mxu0 0.0
    %173 = vmatprep.subr.mxu0 0.0
    %174 = vmatpush1.msra.mxu0 0.0
    %175 = vmatprep.subr.mxu0 0.0
    %176 = vmatpush1.msra.mxu0 0.0
    %177 = vmatprep.subr.mxu0 0.0
    %178 = vmatpush1.msra.mxu0 0.0
    %179 = vmatprep.subr.mxu0 0.0
    %180 = vmatpush1.msra.mxu0 0.0
    %181 = vmatprep.subr.mxu0 0.0
    %182 = vmatpush1.msra.mxu0 0.0
    %183 = vmatprep.subr.mxu0 0.0
    %184 = vmatpush1.msra.mxu0 0.0
    %185 = vmatprep.subr.mxu0 0.0
    %186 = vmatpush1.msra.mxu0 0.0
    %187 = vmatprep.subr.mxu0 0.0
    %188 = vmatpush1.msra.mxu0 0.0
    %189 = vmatprep.subr.mxu0 0.0
    %190 = vmatpush1.msra.mxu0 0.0
    %191 = vmatprep.subr.mxu0 0.0
    %192 = vmatpush1.msra.mxu0 0.0
    %193 = vmatprep.subr.mxu0 0.0
    %194 = vmatpush1.msra.mxu0 0.0
    %195 = vmatprep.subr.mxu0 0.0
    %196 = vmatpush1.msra.mxu0 0.0
    %197 = vmatprep.mubr.f32.mxu0 0.0
    %198 = vmatmul.mubr.f32.gmra.mrb[0].mxu0 %v47
    %v199 = vpop.f32.mrb[0].mxu0
    %v200 = vadd.f32 0.0, %v199
    %v201 = vpop.f32.mrb[0].mxu0
    %v202 = vadd.f32 0.0, %v201
    %203 = vdwg.mxu0
    %v204 = vadd.f32 %v129, %v131
    %v205 = vadd.f32 %v204, %v200
    %v206 = vadd.f32 %v205, %v202
    %207 = vadd.xlane.f32.xlu0 %v206
    %v208 = vpop.xlane.xlu0 %207
    %v209 = vrcp.pop 512.0
    %v210 = vmul.f32 %v208, %v209
    %v211 = vsub.f32 %v129, %v210
    %v212 = vsub.f32 %v131, %v210
    %v213 = vsub.f32 %v200, %v210
    %v214 = vsub.f32 %v202, %v210
    %v215 = vmul.f32 %v211, %v211
    %v216 = vmul.f32 %v212, %v212
    %v217 = vmul.f32 %v213, %v213
    %v218 = vmul.f32 %v214, %v214
    %v219 = vadd.f32 %v215, %v216
    %v220 = vadd.f32 %v219, %v217
    %v221 = vadd.f32 %v220, %v218
    %222 = vadd.xlane.f32.xlu0 %v221
    %v223 = vpop.xlane.xlu0 %222
    %v224 = vmul.f32 %v223, %v209
    %v225 = vld [vmem:[%s2] sm:$0xff]
    %v226 = vadd.f32 %v224, 1e-05
    %v227 = vrsqrt.pop %v226
    %v228 = vmul.f32 %v225, %v227
    %230 = vset.pattern.permute.xlu0 0
    %231 = vperm.xlu0 %230, %v228
    %v232 = vpop.permute.xlu0 %231
    %v234 = vmul.f32 %v211, %v232
    %v235 = vmul.f32 %v212, %v232
    %v236 = vmul.f32 %v213, %v232
    %v237 = vmul.f32 %v214, %v232
    %v238 = vld [vmem:[%s3] sm:$0xff]
    %240 = vset.pattern.permute.xlu0 0
    %241 = vperm.xlu0 %240, %v238
    %v242 = vpop.permute.xlu0 %241
    %v244 = vadd.f32 %v234, %v242
    %v245 = vadd.f32 %v235, %v242
    %v246 = vadd.f32 %v236, %v242
    %v247 = vadd.f32 %v237, %v242
    %v248 = vmax.f32 %v244, 0.0
    %v249 = vmax.f32 %v245, 0.0
    %v250 = vmax.f32 %v246, 0.0
    %v251 = vmax.f32 %v247, 0.0
    %v252 = vld [vmem:[%s4] sm:$0xff]
    %v253 = vld [vmem:[%s4 + $0x8] sm:$0xff]
    %v254 = vld [vmem:[%s4 + $0x10] sm:$0xff]
    %v255 = vld [vmem:[%s4 + $0x18] sm:$0xff]
    %v256 = vld [vmem:[%s4 + $0x20] sm:$0xff]
    %v257 = vld [vmem:[%s4 + $0x28] sm:$0xff]
    %v258 = vld [vmem:[%s4 + $0x30] sm:$0xff]
    %v259 = vld [vmem:[%s4 + $0x38] sm:$0xff]
    %v260 = vld [vmem:[%s4 + $0x40] sm:$0xff]
    %v261 = vld [vmem:[%s4 + $0x48] sm:$0xff]
    %v262 = vld [vmem:[%s4 + $0x50] sm:$0xff]
    %v263 = vld [vmem:[%s4 + $0x58] sm:$0xff]
    %v264 = vld [vmem:[%s4 + $0x60] sm:$0xff]
    %v265 = vld [vmem:[%s4 + $0x68] sm:$0xff]
    %v266 = vld [vmem:[%s4 + $0x70] sm:$0xff]
    %v267 = vld [vmem:[%s4 + $0x78] sm:$0xff]
    %v268 = vld [vmem:[%s4 + $0x80] sm:$0xff]
    %v269 = vld [vmem:[%s4 + $0x88] sm:$0xff]
    %v270 = vld [vmem:[%s4 + $0x90] sm:$0xff]
    %v271 = vld [vmem:[%s4 + $0x98] sm:$0xff]
    %v272 = vld [vmem:[%s4 + $0xa0] sm:$0xff]
    %v273 = vld [vmem:[%s4 + $0xa8] sm:$0xff]
    %v274 = vld [vmem:[%s4 + $0xb0] sm:$0xff]
    %v275 = vld [vmem:[%s4 + $0xb8] sm:$0xff]
    %v276 = vld [vmem:[%s4 + $0xc0] sm:$0xff]
    %v277 = vld [vmem:[%s4 + $0xc8] sm:$0xff]
    %v278 = vld [vmem:[%s4 + $0xd0] sm:$0xff]
    %v279 = vld [vmem:[%s4 + $0xd8] sm:$0xff]
    %v280 = vld [vmem:[%s4 + $0xe0] sm:$0xff]
    %v281 = vld [vmem:[%s4 + $0xe8] sm:$0xff]
    %v282 = vld [vmem:[%s4 + $0xf0] sm:$0xff]
    %v283 = vld [vmem:[%s4 + $0xf8] sm:$0xff]
    %s284 = scalar_lea.vmem %s4, 256
    %v285 = vld [vmem:[%s284] sm:$0xff]
    %v286 = vld [vmem:[%s284 + $0x8] sm:$0xff]
    %v287 = vld [vmem:[%s284 + $0x10] sm:$0xff]
    %v288 = vld [vmem:[%s284 + $0x18] sm:$0xff]
    %v289 = vld [vmem:[%s284 + $0x20] sm:$0xff]
    %v290 = vld [vmem:[%s284 + $0x28] sm:$0xff]
    %v291 = vld [vmem:[%s284 + $0x30] sm:$0xff]
    %v292 = vld [vmem:[%s284 + $0x38] sm:$0xff]
    %v293 = vld [vmem:[%s284 + $0x40] sm:$0xff]
    %v294 = vld [vmem:[%s284 + $0x48] sm:$0xff]
    %v295 = vld [vmem:[%s284 + $0x50] sm:$0xff]
    %v296 = vld [vmem:[%s284 + $0x58] sm:$0xff]
    %v297 = vld [vmem:[%s284 + $0x60] sm:$0xff]
    %v298 = vld [vmem:[%s284 + $0x68] sm:$0xff]
    %v299 = vld [vmem:[%s284 + $0x70] sm:$0xff]
    %v300 = vld [vmem:[%s284 + $0x78] sm:$0xff]
    %v301 = vld [vmem:[%s284 + $0x80] sm:$0xff]
    %v302 = vld [vmem:[%s284 + $0x88] sm:$0xff]
    %v303 = vld [vmem:[%s284 + $0x90] sm:$0xff]
    %v304 = vld [vmem:[%s284 + $0x98] sm:$0xff]
    %v305 = vld [vmem:[%s284 + $0xa0] sm:$0xff]
    %v306 = vld [vmem:[%s284 + $0xa8] sm:$0xff]
    %v307 = vld [vmem:[%s284 + $0xb0] sm:$0xff]
    %v308 = vld [vmem:[%s284 + $0xb8] sm:$0xff]
    %v309 = vld [vmem:[%s284 + $0xc0] sm:$0xff]
    %v310 = vld [vmem:[%s284 + $0xc8] sm:$0xff]
    %v311 = vld [vmem:[%s284 + $0xd0] sm:$0xff]
    %v312 = vld [vmem:[%s284 + $0xd8] sm:$0xff]
    %v313 = vld [vmem:[%s284 + $0xe0] sm:$0xff]
    %v314 = vld [vmem:[%s284 + $0xe8] sm:$0xff]
    %v315 = vld [vmem:[%s284 + $0xf0] sm:$0xff]
    %v316 = vld [vmem:[%s284 + $0xf8] sm:$0xff]
    %v319 = vrot.slane %v248, 1
    %v320 = vrot.slane %v249, 1
    %323 = vmatprep.subr.mxu0 0.0
    %324 = vmatpush1.msra.mxu0 %v285
    %325 = vmatprep.subr.mxu0 0.0
    %326 = vmatpush1.msra.mxu0 %v286
    %327 = vmatprep.subr.mxu0 0.0
    %328 = vmatpush1.msra.mxu0 %v287
    %329 = vmatprep.subr.mxu0 0.0
    %330 = vmatpush1.msra.mxu0 %v288
    %331 = vmatprep.subr.mxu0 0.0
    %332 = vmatpush1.msra.mxu0 %v289
    %333 = vmatprep.subr.mxu0 0.0
    %334 = vmatpush1.msra.mxu0 %v290
    %335 = vmatprep.subr.mxu0 0.0
    %336 = vmatpush1.msra.mxu0 %v291
    %337 = vmatprep.subr.mxu0 0.0
    %338 = vmatpush1.msra.mxu0 %v292
    %339 = vmatprep.subr.mxu0 0.0
    %340 = vmatpush1.msra.mxu0 %v293
    %341 = vmatprep.subr.mxu0 0.0
    %342 = vmatpush1.msra.mxu0 %v294
    %343 = vmatprep.subr.mxu0 0.0
    %344 = vmatpush1.msra.mxu0 %v295
    %345 = vmatprep.subr.mxu0 0.0
    %346 = vmatpush1.msra.mxu0 %v296
    %347 = vmatprep.subr.mxu0 0.0
    %348 = vmatpush1.msra.mxu0 %v297
    %349 = vmatprep.subr.mxu0 0.0
    %350 = vmatpush1.msra.mxu0 %v298
    %351 = vmatprep.subr.mxu0 0.0
    %352 = vmatpush1.msra.mxu0 %v299
    %353 = vmatprep.subr.mxu0 0.0
    %354 = vmatpush1.msra.mxu0 %v300
    %355 = vmatprep.subr.mxu0 0.0
    %356 = vmatpush1.msra.mxu0 %v301
    %357 = vmatprep.subr.mxu0 0.0
    %358 = vmatpush1.msra.mxu0 %v302
    %359 = vmatprep.subr.mxu0 0.0
    %360 = vmatpush1.msra.mxu0 %v303
    %361 = vmatprep.subr.mxu0 0.0
    %362 = vmatpush1.msra.mxu0 %v304
    %363 = vmatprep.subr.mxu0 0.0
    %364 = vmatpush1.msra.mxu0 %v305
    %365 = vmatprep.subr.mxu0 0.0
    %366 = vmatpush1.msra.mxu0 %v306
    %367 = vmatprep.subr.mxu0 0.0
    %368 = vmatpush1.msra.mxu0 %v307
    %369 = vmatprep.subr.mxu0 0.0
    %370 = vmatpush1.msra.mxu0 %v308
    %371 = vmatprep.subr.mxu0 0.0
    %372 = vmatpush1.msra.mxu0 %v309
    %373 = vmatprep.subr.mxu0 0.0
    %374 = vmatpush1.msra.mxu0 %v310
    %375 = vmatprep.subr.mxu0 0.0
    %376 = vmatpush1.msra.mxu0 %v311
    %377 = vmatprep.subr.mxu0 0.0
    %378 = vmatpush1.msra.mxu0 %v312
    %379 = vmatprep.subr.mxu0 0.0
    %380 = vmatpush1.msra.mxu0 %v313
    %381 = vmatprep.subr.mxu0 0.0
    %382 = vmatpush1.msra.mxu0 %v314
    %383 = vmatprep.subr.mxu0 0.0
    %384 = vmatpush1.msra.mxu0 %v315
    %385 = vmatprep.subr.mxu0 0.0
    %386 = vmatpush1.msra.mxu0 %v316
    %387 = vmatprep.mubr.f32.mxu0 %v320
    %388 = vmatmul.mubr.f32.gmra.mrb[0].mxu0 %v319
    %v389 = vpop.f32.mrb[0].mxu0
    %v390 = vadd.f32 0.0, %v389
    %v391 = vpop.f32.mrb[0].mxu0
    %392 = vdwg.mxu0
    %393 = vmatprep.subr.mxu0 0.0
    %394 = vmatpush1.msra.mxu0 %v252
    %395 = vmatprep.subr.mxu0 0.0
    %396 = vmatpush1.msra.mxu0 %v253
    %397 = vmatprep.subr.mxu0 0.0
    %398 = vmatpush1.msra.mxu0 %v254
    %399 = vmatprep.subr.mxu0 0.0
    %400 = vmatpush1.msra.mxu0 %v255
    %401 = vmatprep.subr.mxu0 0.0
    %402 = vmatpush1.msra.mxu0 %v256
    %403 = vmatprep.subr.mxu0 0.0
    %404 = vmatpush1.msra.mxu0 %v257
    %405 = vmatprep.subr.mxu0 0.0
    %406 = vmatpush1.msra.mxu0 %v258
    %407 = vmatprep.subr.mxu0 0.0
    %408 = vmatpush1.msra.mxu0 %v259
    %409 = vmatprep.subr.mxu0 0.0
    %410 = vmatpush1.msra.mxu0 %v260
    %411 = vmatprep.subr.mxu0 0.0
    %412 = vmatpush1.msra.mxu0 %v261
    %413 = vmatprep.subr.mxu0 0.0
    %414 = vmatpush1.msra.mxu0 %v262
    %415 = vmatprep.subr.mxu0 0.0
    %416 = vmatpush1.msra.mxu0 %v263
    %417 = vmatprep.subr.mxu0 0.0
    %418 = vmatpush1.msra.mxu0 %v264
    %419 = vmatprep.subr.mxu0 0.0
    %420 = vmatpush1.msra.mxu0 %v265
    %421 = vmatprep.subr.mxu0 0.0
    %422 = vmatpush1.msra.mxu0 %v266
    %423 = vmatprep.subr.mxu0 0.0
    %424 = vmatpush1.msra.mxu0 %v267
    %425 = vmatprep.subr.mxu0 0.0
    %426 = vmatpush1.msra.mxu0 %v268
    %427 = vmatprep.subr.mxu0 0.0
    %428 = vmatpush1.msra.mxu0 %v269
    %429 = vmatprep.subr.mxu0 0.0
    %430 = vmatpush1.msra.mxu0 %v270
    %431 = vmatprep.subr.mxu0 0.0
    %432 = vmatpush1.msra.mxu0 %v271
    %433 = vmatprep.subr.mxu0 0.0
    %434 = vmatpush1.msra.mxu0 %v272
    %435 = vmatprep.subr.mxu0 0.0
    %436 = vmatpush1.msra.mxu0 %v273
    %437 = vmatprep.subr.mxu0 0.0
    %438 = vmatpush1.msra.mxu0 %v274
    %439 = vmatprep.subr.mxu0 0.0
    %440 = vmatpush1.msra.mxu0 %v275
    %441 = vmatprep.subr.mxu0 0.0
    %442 = vmatpush1.msra.mxu0 %v276
    %443 = vmatprep.subr.mxu0 0.0
    %444 = vmatpush1.msra.mxu0 %v277
    %445 = vmatprep.subr.mxu0 0.0
    %446 = vmatpush1.msra.mxu0 %v278
    %447 = vmatprep.subr.mxu0 0.0
    %448 = vmatpush1.msra.mxu0 %v279
    %449 = vmatprep.subr.mxu0 0.0
    %450 = vmatpush1.msra.mxu0 %v280
    %451 = vmatprep.subr.mxu0 0.0
    %452 = vmatpush1.msra.mxu0 %v281
    %453 = vmatprep.subr.mxu0 0.0
    %454 = vmatpush1.msra.mxu0 %v282
    %455 = vmatprep.subr.mxu0 0.0
    %456 = vmatpush1.msra.mxu0 %v283
    %457 = vmatprep.mubr.f32.mxu0 %v249
    %458 = vmatmul.mubr.f32.gmra.mrb[0].mxu0 %v248
    %v459 = vpop.f32.mrb[0].mxu0
    %v460 = vadd.f32 %v390, %v459
    %v461 = vpop.f32.mrb[0].mxu0
    %462 = vdwg.mxu0
    %s463 = scalar_lea.vmem %s4, 512
    %v464 = vld [vmem:[%s463] sm:$0xff]
    %v465 = vld [vmem:[%s463 + $0x8] sm:$0xff]
    %v466 = vld [vmem:[%s463 + $0x10] sm:$0xff]
    %v467 = vld [vmem:[%s463 + $0x18] sm:$0xff]
    %v468 = vld [vmem:[%s463 + $0x20] sm:$0xff]
    %v469 = vld [vmem:[%s463 + $0x28] sm:$0xff]
    %v470 = vld [vmem:[%s463 + $0x30] sm:$0xff]
    %v471 = vld [vmem:[%s463 + $0x38] sm:$0xff]
    %v472 = vld [vmem:[%s463 + $0x40] sm:$0xff]
    %v473 = vld [vmem:[%s463 + $0x48] sm:$0xff]
    %v474 = vld [vmem:[%s463 + $0x50] sm:$0xff]
    %v475 = vld [vmem:[%s463 + $0x58] sm:$0xff]
    %v476 = vld [vmem:[%s463 + $0x60] sm:$0xff]
    %v477 = vld [vmem:[%s463 + $0x68] sm:$0xff]
    %v478 = vld [vmem:[%s463 + $0x70] sm:$0xff]
    %v479 = vld [vmem:[%s463 + $0x78] sm:$0xff]
    %v480 = vld [vmem:[%s463 + $0x80] sm:$0xff]
    %v481 = vld [vmem:[%s463 + $0x88] sm:$0xff]
    %v482 = vld [vmem:[%s463 + $0x90] sm:$0xff]
    %v483 = vld [vmem:[%s463 + $0x98] sm:$0xff]
    %v484 = vld [vmem:[%s463 + $0xa0] sm:$0xff]
    %v485 = vld [vmem:[%s463 + $0xa8] sm:$0xff]
    %v486 = vld [vmem:[%s463 + $0xb0] sm:$0xff]
    %v487 = vld [vmem:[%s463 + $0xb8] sm:$0xff]
    %v488 = vld [vmem:[%s463 + $0xc0] sm:$0xff]
    %v489 = vld [vmem:[%s463 + $0xc8] sm:$0xff]
    %v490 = vld [vmem:[%s463 + $0xd0] sm:$0xff]
    %v491 = vld [vmem:[%s463 + $0xd8] sm:$0xff]
    %v492 = vld [vmem:[%s463 + $0xe0] sm:$0xff]
    %v493 = vld [vmem:[%s463 + $0xe8] sm:$0xff]
    %v494 = vld [vmem:[%s463 + $0xf0] sm:$0xff]
    %v495 = vld [vmem:[%s463 + $0xf8] sm:$0xff]
    %v496 = vrot.slane %v248, 2
    %v497 = vrot.slane %v249, 2
    %500 = vmatprep.subr.mxu0 0.0
    %501 = vmatpush1.msra.mxu0 %v464
    %502 = vmatprep.subr.mxu0 0.0
    %503 = vmatpush1.msra.mxu0 %v465
    %504 = vmatprep.subr.mxu0 0.0
    %505 = vmatpush1.msra.mxu0 %v466
    %506 = vmatprep.subr.mxu0 0.0
    %507 = vmatpush1.msra.mxu0 %v467
    %508 = vmatprep.subr.mxu0 0.0
    %509 = vmatpush1.msra.mxu0 %v468
    %510 = vmatprep.subr.mxu0 0.0
    %511 = vmatpush1.msra.mxu0 %v469
    %512 = vmatprep.subr.mxu0 0.0
    %513 = vmatpush1.msra.mxu0 %v470
    %514 = vmatprep.subr.mxu0 0.0
    %515 = vmatpush1.msra.mxu0 %v471
    %516 = vmatprep.subr.mxu0 0.0
    %517 = vmatpush1.msra.mxu0 %v472
    %518 = vmatprep.subr.mxu0 0.0
    %519 = vmatpush1.msra.mxu0 %v473
    %520 = vmatprep.subr.mxu0 0.0
    %521 = vmatpush1.msra.mxu0 %v474
    %522 = vmatprep.subr.mxu0 0.0
    %523 = vmatpush1.msra.mxu0 %v475
    %524 = vmatprep.subr.mxu0 0.0
    %525 = vmatpush1.msra.mxu0 %v476
    %526 = vmatprep.subr.mxu0 0.0
    %527 = vmatpush1.msra.mxu0 %v477
    %528 = vmatprep.subr.mxu0 0.0
    %529 = vmatpush1.msra.mxu0 %v478
    %530 = vmatprep.subr.mxu0 0.0
    %531 = vmatpush1.msra.mxu0 %v479
    %532 = vmatprep.subr.mxu0 0.0
    %533 = vmatpush1.msra.mxu0 %v480
    %534 = vmatprep.subr.mxu0 0.0
    %535 = vmatpush1.msra.mxu0 %v481
    %536 = vmatprep.subr.mxu0 0.0
    %537 = vmatpush1.msra.mxu0 %v482
    %538 = vmatprep.subr.mxu0 0.0
    %539 = vmatpush1.msra.mxu0 %v483
    %540 = vmatprep.subr.mxu0 0.0
    %541 = vmatpush1.msra.mxu0 %v484
    %542 = vmatprep.subr.mxu0 0.0
    %543 = vmatpush1.msra.mxu0 %v485
    %544 = vmatprep.subr.mxu0 0.0
    %545 = vmatpush1.msra.mxu0 %v486
    %546 = vmatprep.subr.mxu0 0.0
    %547 = vmatpush1.msra.mxu0 %v487
    %548 = vmatprep.subr.mxu0 0.0
    %549 = vmatpush1.msra.mxu0 %v488
    %550 = vmatprep.subr.mxu0 0.0
    %551 = vmatpush1.msra.mxu0 %v489
    %552 = vmatprep.subr.mxu0 0.0
    %553 = vmatpush1.msra.mxu0 %v490
    %554 = vmatprep.subr.mxu0 0.0
    %555 = vmatpush1.msra.mxu0 %v491
    %556 = vmatprep.subr.mxu0 0.0
    %557 = vmatpush1.msra.mxu0 %v492
    %558 = vmatprep.subr.mxu0 0.0
    %559 = vmatpush1.msra.mxu0 %v493
    %560 = vmatprep.subr.mxu0 0.0
    %561 = vmatpush1.msra.mxu0 %v494
    %562 = vmatprep.subr.mxu0 0.0
    %563 = vmatpush1.msra.mxu0 %v495
    %564 = vmatprep.mubr.f32.mxu0 %v497
    %565 = vmatmul.mubr.f32.gmra.mrb[0].mxu0 %v496
    %v566 = vpop.f32.mrb[0].mxu0
    %v567 = vadd.f32 0.0, %v566
    %v568 = vpop.f32.mrb[0].mxu0
    %569 = vdwg.mxu0
    %v570 = vadd.f32 %v460, %v567
    %s571 = scalar_lea.vmem %s4, 768
    %v572 = vld [vmem:[%s571] sm:$0xff]
    %v573 = vld [vmem:[%s571 + $0x8] sm:$0xff]
    %v574 = vld [vmem:[%s571 + $0x10] sm:$0xff]
    %v575 = vld [vmem:[%s571 + $0x18] sm:$0xff]
    %v576 = vld [vmem:[%s571 + $0x20] sm:$0xff]
    %v577 = vld [vmem:[%s571 + $0x28] sm:$0xff]
    %v578 = vld [vmem:[%s571 + $0x30] sm:$0xff]
    %v579 = vld [vmem:[%s571 + $0x38] sm:$0xff]
    %v580 = vld [vmem:[%s571 + $0x40] sm:$0xff]
    %v581 = vld [vmem:[%s571 + $0x48] sm:$0xff]
    %v582 = vld [vmem:[%s571 + $0x50] sm:$0xff]
    %v583 = vld [vmem:[%s571 + $0x58] sm:$0xff]
    %v584 = vld [vmem:[%s571 + $0x60] sm:$0xff]
    %v585 = vld [vmem:[%s571 + $0x68] sm:$0xff]
    %v586 = vld [vmem:[%s571 + $0x70] sm:$0xff]
    %v587 = vld [vmem:[%s571 + $0x78] sm:$0xff]
    %v588 = vld [vmem:[%s571 + $0x80] sm:$0xff]
    %v589 = vld [vmem:[%s571 + $0x88] sm:$0xff]
    %v590 = vld [vmem:[%s571 + $0x90] sm:$0xff]
    %v591 = vld [vmem:[%s571 + $0x98] sm:$0xff]
    %v592 = vld [vmem:[%s571 + $0xa0] sm:$0xff]
    %v593 = vld [vmem:[%s571 + $0xa8] sm:$0xff]
    %v594 = vld [vmem:[%s571 + $0xb0] sm:$0xff]
    %v595 = vld [vmem:[%s571 + $0xb8] sm:$0xff]
    %v596 = vld [vmem:[%s571 + $0xc0] sm:$0xff]
    %v597 = vld [vmem:[%s571 + $0xc8] sm:$0xff]
    %v598 = vld [vmem:[%s571 + $0xd0] sm:$0xff]
    %v599 = vld [vmem:[%s571 + $0xd8] sm:$0xff]
    %v600 = vld [vmem:[%s571 + $0xe0] sm:$0xff]
    %v601 = vld [vmem:[%s571 + $0xe8] sm:$0xff]
    %v602 = vld [vmem:[%s571 + $0xf0] sm:$0xff]
    %v603 = vld [vmem:[%s571 + $0xf8] sm:$0xff]
    %v604 = vrot.slane %v248, 3
    %v605 = vrot.slane %v249, 3
    %608 = vmatprep.subr.mxu0 0.0
    %609 = vmatpush1.msra.mxu0 %v572
    %610 = vmatprep.subr.mxu0 0.0
    %611 = vmatpush1.msra.mxu0 %v573
    %612 = vmatprep.subr.mxu0 0.0
    %613 = vmatpush1.msra.mxu0 %v574
    %614 = vmatprep.subr.mxu0 0.0
    %615 = vmatpush1.msra.mxu0 %v575
    %616 = vmatprep.subr.mxu0 0.0
    %617 = vmatpush1.msra.mxu0 %v576
    %618 = vmatprep.subr.mxu0 0.0
    %619 = vmatpush1.msra.mxu0 %v577
    %620 = vmatprep.subr.mxu0 0.0
    %621 = vmatpush1.msra.mxu0 %v578
    %622 = vmatprep.subr.mxu0 0.0
    %623 = vmatpush1.msra.mxu0 %v579
    %624 = vmatprep.subr.mxu0 0.0
    %625 = vmatpush1.msra.mxu0 %v580
    %626 = vmatprep.subr.mxu0 0.0
    %627 = vmatpush1.msra.mxu0 %v581
    %628 = vmatprep.subr.mxu0 0.0
    %629 = vmatpush1.msra.mxu0 %v582
    %630 = vmatprep.subr.mxu0 0.0
    %631 = vmatpush1.msra.mxu0 %v583
    %632 = vmatprep.subr.mxu0 0.0
    %633 = vmatpush1.msra.mxu0 %v584
    %634 = vmatprep.subr.mxu0 0.0
    %635 = vmatpush1.msra.mxu0 %v585
    %636 = vmatprep.subr.mxu0 0.0
    %637 = vmatpush1.msra.mxu0 %v586
    %638 = vmatprep.subr.mxu0 0.0
    %639 = vmatpush1.msra.mxu0 %v587
    %640 = vmatprep.subr.mxu0 0.0
    %641 = vmatpush1.msra.mxu0 %v588
    %642 = vmatprep.subr.mxu0 0.0
    %643 = vmatpush1.msra.mxu0 %v589
    %644 = vmatprep.subr.mxu0 0.0
    %645 = vmatpush1.msra.mxu0 %v590
    %646 = vmatprep.subr.mxu0 0.0
    %647 = vmatpush1.msra.mxu0 %v591
    %648 = vmatprep.subr.mxu0 0.0
    %649 = vmatpush1.msra.mxu0 %v592
    %650 = vmatprep.subr.mxu0 0.0
    %651 = vmatpush1.msra.mxu0 %v593
    %652 = vmatprep.subr.mxu0 0.0
    %653 = vmatpush1.msra.mxu0 %v594
    %654 = vmatprep.subr.mxu0 0.0
    %655 = vmatpush1.msra.mxu0 %v595
    %656 = vmatprep.subr.mxu0 0.0
    %657 = vmatpush1.msra.mxu0 %v596
    %658 = vmatprep.subr.mxu0 0.0
    %659 = vmatpush1.msra.mxu0 %v597
    %660 = vmatprep.subr.mxu0 0.0
    %661 = vmatpush1.msra.mxu0 %v598
    %662 = vmatprep.subr.mxu0 0.0
    %663 = vmatpush1.msra.mxu0 %v599
    %664 = vmatprep.subr.mxu0 0.0
    %665 = vmatpush1.msra.mxu0 %v600
    %666 = vmatprep.subr.mxu0 0.0
    %667 = vmatpush1.msra.mxu0 %v601
    %668 = vmatprep.subr.mxu0 0.0
    %669 = vmatpush1.msra.mxu0 %v602
    %670 = vmatprep.subr.mxu0 0.0
    %671 = vmatpush1.msra.mxu0 %v603
    %672 = vmatprep.mubr.f32.mxu0 %v605
    %673 = vmatmul.mubr.f32.gmra.mrb[0].mxu0 %v604
    %v674 = vpop.f32.mrb[0].mxu0
    %v675 = vadd.f32 0.0, %v674
    %v676 = vpop.f32.mrb[0].mxu0
    %677 = vdwg.mxu0
    %v678 = vadd.f32 %v570, %v675
    %s679 = scalar_lea.vmem %s4, 1024
    %v680 = vld [vmem:[%s679] sm:$0xff]
    %v681 = vld [vmem:[%s679 + $0x8] sm:$0xff]
    %v682 = vld [vmem:[%s679 + $0x10] sm:$0xff]
    %v683 = vld [vmem:[%s679 + $0x18] sm:$0xff]
    %v684 = vld [vmem:[%s679 + $0x20] sm:$0xff]
    %v685 = vld [vmem:[%s679 + $0x28] sm:$0xff]
    %v686 = vld [vmem:[%s679 + $0x30] sm:$0xff]
    %v687 = vld [vmem:[%s679 + $0x38] sm:$0xff]
    %v688 = vld [vmem:[%s679 + $0x40] sm:$0xff]
    %v689 = vld [vmem:[%s679 + $0x48] sm:$0xff]
    %v690 = vld [vmem:[%s679 + $0x50] sm:$0xff]
    %v691 = vld [vmem:[%s679 + $0x58] sm:$0xff]
    %v692 = vld [vmem:[%s679 + $0x60] sm:$0xff]
    %v693 = vld [vmem:[%s679 + $0x68] sm:$0xff]
    %v694 = vld [vmem:[%s679 + $0x70] sm:$0xff]
    %v695 = vld [vmem:[%s679 + $0x78] sm:$0xff]
    %v696 = vld [vmem:[%s679 + $0x80] sm:$0xff]
    %v697 = vld [vmem:[%s679 + $0x88] sm:$0xff]
    %v698 = vld [vmem:[%s679 + $0x90] sm:$0xff]
    %v699 = vld [vmem:[%s679 + $0x98] sm:$0xff]
    %v700 = vld [vmem:[%s679 + $0xa0] sm:$0xff]
    %v701 = vld [vmem:[%s679 + $0xa8] sm:$0xff]
    %v702 = vld [vmem:[%s679 + $0xb0] sm:$0xff]
    %v703 = vld [vmem:[%s679 + $0xb8] sm:$0xff]
    %v704 = vld [vmem:[%s679 + $0xc0] sm:$0xff]
    %v705 = vld [vmem:[%s679 + $0xc8] sm:$0xff]
    %v706 = vld [vmem:[%s679 + $0xd0] sm:$0xff]
    %v707 = vld [vmem:[%s679 + $0xd8] sm:$0xff]
    %v708 = vld [vmem:[%s679 + $0xe0] sm:$0xff]
    %v709 = vld [vmem:[%s679 + $0xe8] sm:$0xff]
    %v710 = vld [vmem:[%s679 + $0xf0] sm:$0xff]
    %v711 = vld [vmem:[%s679 + $0xf8] sm:$0xff]
    %v712 = vrot.slane %v248, 4
    %v713 = vrot.slane %v249, 4
    %716 = vmatprep.subr.mxu0 0.0
    %717 = vmatpush1.msra.mxu0 %v680
    %718 = vmatprep.subr.mxu0 0.0
    %719 = vmatpush1.msra.mxu0 %v681
    %720 = vmatprep.subr.mxu0 0.0
    %721 = vmatpush1.msra.mxu0 %v682
    %722 = vmatprep.subr.mxu0 0.0
    %723 = vmatpush1.msra.mxu0 %v683
    %724 = vmatprep.subr.mxu0 0.0
    %725 = vmatpush1.msra.mxu0 %v684
    %726 = vmatprep.subr.mxu0 0.0
    %727 = vmatpush1.msra.mxu0 %v685
    %728 = vmatprep.subr.mxu0 0.0
    %729 = vmatpush1.msra.mxu0 %v686
    %730 = vmatprep.subr.mxu0 0.0
    %731 = vmatpush1.msra.mxu0 %v687
    %732 = vmatprep.subr.mxu0 0.0
    %733 = vmatpush1.msra.mxu0 %v688
    %734 = vmatprep.subr.mxu0 0.0
    %735 = vmatpush1.msra.mxu0 %v689
    %736 = vmatprep.subr.mxu0 0.0
    %737 = vmatpush1.msra.mxu0 %v690
    %738 = vmatprep.subr.mxu0 0.0
    %739 = vmatpush1.msra.mxu0 %v691
    %740 = vmatprep.subr.mxu0 0.0
    %741 = vmatpush1.msra.mxu0 %v692
    %742 = vmatprep.subr.mxu0 0.0
    %743 = vmatpush1.msra.mxu0 %v693
    %744 = vmatprep.subr.mxu0 0.0
    %745 = vmatpush1.msra.mxu0 %v694
    %746 = vmatprep.subr.mxu0 0.0
    %747 = vmatpush1.msra.mxu0 %v695
    %748 = vmatprep.subr.mxu0 0.0
    %749 = vmatpush1.msra.mxu0 %v696
    %750 = vmatprep.subr.mxu0 0.0
    %751 = vmatpush1.msra.mxu0 %v697
    %752 = vmatprep.subr.mxu0 0.0
    %753 = vmatpush1.msra.mxu0 %v698
    %754 = vmatprep.subr.mxu0 0.0
    %755 = vmatpush1.msra.mxu0 %v699
    %756 = vmatprep.subr.mxu0 0.0
    %757 = vmatpush1.msra.mxu0 %v700
    %758 = vmatprep.subr.mxu0 0.0
    %759 = vmatpush1.msra.mxu0 %v701
    %760 = vmatprep.subr.mxu0 0.0
    %761 = vmatpush1.msra.mxu0 %v702
    %762 = vmatprep.subr.mxu0 0.0
    %763 = vmatpush1.msra.mxu0 %v703
    %764 = vmatprep.subr.mxu0 0.0
    %765 = vmatpush1.msra.mxu0 %v704
    %766 = vmatprep.subr.mxu0 0.0
    %767 = vmatpush1.msra.mxu0 %v705
    %768 = vmatprep.subr.mxu0 0.0
    %769 = vmatpush1.msra.mxu0 %v706
    %770 = vmatprep.subr.mxu0 0.0
    %771 = vmatpush1.msra.mxu0 %v707
    %772 = vmatprep.subr.mxu0 0.0
    %773 = vmatpush1.msra.mxu0 %v708
    %774 = vmatprep.subr.mxu0 0.0
    %775 = vmatpush1.msra.mxu0 %v709
    %776 = vmatprep.subr.mxu0 0.0
    %777 = vmatpush1.msra.mxu0 %v710
    %778 = vmatprep.subr.mxu0 0.0
    %779 = vmatpush1.msra.mxu0 %v711
    %780 = vmatprep.mubr.f32.mxu0 %v713
    %781 = vmatmul.mubr.f32.gmra.mrb[0].mxu0 %v712
    %v782 = vpop.f32.mrb[0].mxu0
    %v783 = vadd.f32 0.0, %v782
    %v784 = vpop.f32.mrb[0].mxu0
    %785 = vdwg.mxu0
    %v786 = vadd.f32 %v678, %v783
    %s787 = scalar_lea.vmem %s4, 1280
    %v788 = vld [vmem:[%s787] sm:$0xff]
    %v789 = vld [vmem:[%s787 + $0x8] sm:$0xff]
    %v790 = vld [vmem:[%s787 + $0x10] sm:$0xff]
    %v791 = vld [vmem:[%s787 + $0x18] sm:$0xff]
    %v792 = vld [vmem:[%s787 + $0x20] sm:$0xff]
    %v793 = vld [vmem:[%s787 + $0x28] sm:$0xff]
    %v794 = vld [vmem:[%s787 + $0x30] sm:$0xff]
    %v795 = vld [vmem:[%s787 + $0x38] sm:$0xff]
    %v796 = vld [vmem:[%s787 + $0x40] sm:$0xff]
    %v797 = vld [vmem:[%s787 + $0x48] sm:$0xff]
    %v798 = vld [vmem:[%s787 + $0x50] sm:$0xff]
    %v799 = vld [vmem:[%s787 + $0x58] sm:$0xff]
    %v800 = vld [vmem:[%s787 + $0x60] sm:$0xff]
    %v801 = vld [vmem:[%s787 + $0x68] sm:$0xff]
    %v802 = vld [vmem:[%s787 + $0x70] sm:$0xff]
    %v803 = vld [vmem:[%s787 + $0x78] sm:$0xff]
    %v804 = vld [vmem:[%s787 + $0x80] sm:$0xff]
    %v805 = vld [vmem:[%s787 + $0x88] sm:$0xff]
    %v806 = vld [vmem:[%s787 + $0x90] sm:$0xff]
    %v807 = vld [vmem:[%s787 + $0x98] sm:$0xff]
    %v808 = vld [vmem:[%s787 + $0xa0] sm:$0xff]
    %v809 = vld [vmem:[%s787 + $0xa8] sm:$0xff]
    %v810 = vld [vmem:[%s787 + $0xb0] sm:$0xff]
    %v811 = vld [vmem:[%s787 + $0xb8] sm:$0xff]
    %v812 = vld [vmem:[%s787 + $0xc0] sm:$0xff]
    %v813 = vld [vmem:[%s787 + $0xc8] sm:$0xff]
    %v814 = vld [vmem:[%s787 + $0xd0] sm:$0xff]
    %v815 = vld [vmem:[%s787 + $0xd8] sm:$0xff]
    %v816 = vld [vmem:[%s787 + $0xe0] sm:$0xff]
    %v817 = vld [vmem:[%s787 + $0xe8] sm:$0xff]
    %v818 = vld [vmem:[%s787 + $0xf0] sm:$0xff]
    %v819 = vld [vmem:[%s787 + $0xf8] sm:$0xff]
    %v820 = vrot.slane %v248, 5
    %v821 = vrot.slane %v249, 5
    %824 = vmatprep.subr.mxu0 0.0
    %825 = vmatpush1.msra.mxu0 %v788
    %826 = vmatprep.subr.mxu0 0.0
    %827 = vmatpush1.msra.mxu0 %v789
    %828 = vmatprep.subr.mxu0 0.0
    %829 = vmatpush1.msra.mxu0 %v790
    %830 = vmatprep.subr.mxu0 0.0
    %831 = vmatpush1.msra.mxu0 %v791
    %832 = vmatprep.subr.mxu0 0.0
    %833 = vmatpush1.msra.mxu0 %v792
    %834 = vmatprep.subr.mxu0 0.0
    %835 = vmatpush1.msra.mxu0 %v793
    %836 = vmatprep.subr.mxu0 0.0
    %837 = vmatpush1.msra.mxu0 %v794
    %838 = vmatprep.subr.mxu0 0.0
    %839 = vmatpush1.msra.mxu0 %v795
    %840 = vmatprep.subr.mxu0 0.0
    %841 = vmatpush1.msra.mxu0 %v796
    %842 = vmatprep.subr.mxu0 0.0
    %843 = vmatpush1.msra.mxu0 %v797
    %844 = vmatprep.subr.mxu0 0.0
    %845 = vmatpush1.msra.mxu0 %v798
    %846 = vmatprep.subr.mxu0 0.0
    %847 = vmatpush1.msra.mxu0 %v799
    %848 = vmatprep.subr.mxu0 0.0
    %849 = vmatpush1.msra.mxu0 %v800
    %850 = vmatprep.subr.mxu0 0.0
    %851 = vmatpush1.msra.mxu0 %v801
    %852 = vmatprep.subr.mxu0 0.0
    %853 = vmatpush1.msra.mxu0 %v802
    %854 = vmatprep.subr.mxu0 0.0
    %855 = vmatpush1.msra.mxu0 %v803
    %856 = vmatprep.subr.mxu0 0.0
    %857 = vmatpush1.msra.mxu0 %v804
    %858 = vmatprep.subr.mxu0 0.0
    %859 = vmatpush1.msra.mxu0 %v805
    %860 = vmatprep.subr.mxu0 0.0
    %861 = vmatpush1.msra.mxu0 %v806
    %862 = vmatprep.subr.mxu0 0.0
    %863 = vmatpush1.msra.mxu0 %v807
    %864 = vmatprep.subr.mxu0 0.0
    %865 = vmatpush1.msra.mxu0 %v808
    %866 = vmatprep.subr.mxu0 0.0
    %867 = vmatpush1.msra.mxu0 %v809
    %868 = vmatprep.subr.mxu0 0.0
    %869 = vmatpush1.msra.mxu0 %v810
    %870 = vmatprep.subr.mxu0 0.0
    %871 = vmatpush1.msra.mxu0 %v811
    %872 = vmatprep.subr.mxu0 0.0
    %873 = vmatpush1.msra.mxu0 %v812
    %874 = vmatprep.subr.mxu0 0.0
    %875 = vmatpush1.msra.mxu0 %v813
    %876 = vmatprep.subr.mxu0 0.0
    %877 = vmatpush1.msra.mxu0 %v814
    %878 = vmatprep.subr.mxu0 0.0
    %879 = vmatpush1.msra.mxu0 %v815
    %880 = vmatprep.subr.mxu0 0.0
    %881 = vmatpush1.msra.mxu0 %v816
    %882 = vmatprep.subr.mxu0 0.0
    %883 = vmatpush1.msra.mxu0 %v817
    %884 = vmatprep.subr.mxu0 0.0
    %885 = vmatpush1.msra.mxu0 %v818
    %886 = vmatprep.subr.mxu0 0.0
    %887 = vmatpush1.msra.mxu0 %v819
    %888 = vmatprep.mubr.f32.mxu0 %v821
    %889 = vmatmul.mubr.f32.gmra.mrb[0].mxu0 %v820
    %v890 = vpop.f32.mrb[0].mxu0
    %v891 = vadd.f32 0.0, %v890
    %v892 = vpop.f32.mrb[0].mxu0
    %893 = vdwg.mxu0
    %v894 = vadd.f32 %v786, %v891
    %s895 = scalar_lea.vmem %s4, 1536
    %v896 = vld [vmem:[%s895] sm:$0xff]
    %v897 = vld [vmem:[%s895 + $0x8] sm:$0xff]
    %v898 = vld [vmem:[%s895 + $0x10] sm:$0xff]
    %v899 = vld [vmem:[%s895 + $0x18] sm:$0xff]
    %v900 = vld [vmem:[%s895 + $0x20] sm:$0xff]
    %v901 = vld [vmem:[%s895 + $0x28] sm:$0xff]
    %v902 = vld [vmem:[%s895 + $0x30] sm:$0xff]
    %v903 = vld [vmem:[%s895 + $0x38] sm:$0xff]
    %v904 = vld [vmem:[%s895 + $0x40] sm:$0xff]
    %v905 = vld [vmem:[%s895 + $0x48] sm:$0xff]
    %v906 = vld [vmem:[%s895 + $0x50] sm:$0xff]
    %v907 = vld [vmem:[%s895 + $0x58] sm:$0xff]
    %v908 = vld [vmem:[%s895 + $0x60] sm:$0xff]
    %v909 = vld [vmem:[%s895 + $0x68] sm:$0xff]
    %v910 = vld [vmem:[%s895 + $0x70] sm:$0xff]
    %v911 = vld [vmem:[%s895 + $0x78] sm:$0xff]
    %v912 = vld [vmem:[%s895 + $0x80] sm:$0xff]
    %v913 = vld [vmem:[%s895 + $0x88] sm:$0xff]
    %v914 = vld [vmem:[%s895 + $0x90] sm:$0xff]
    %v915 = vld [vmem:[%s895 + $0x98] sm:$0xff]
    %v916 = vld [vmem:[%s895 + $0xa0] sm:$0xff]
    %v917 = vld [vmem:[%s895 + $0xa8] sm:$0xff]
    %v918 = vld [vmem:[%s895 + $0xb0] sm:$0xff]
    %v919 = vld [vmem:[%s895 + $0xb8] sm:$0xff]
    %v920 = vld [vmem:[%s895 + $0xc0] sm:$0xff]
    %v921 = vld [vmem:[%s895 + $0xc8] sm:$0xff]
    %v922 = vld [vmem:[%s895 + $0xd0] sm:$0xff]
    %v923 = vld [vmem:[%s895 + $0xd8] sm:$0xff]
    %v924 = vld [vmem:[%s895 + $0xe0] sm:$0xff]
    %v925 = vld [vmem:[%s895 + $0xe8] sm:$0xff]
    %v926 = vld [vmem:[%s895 + $0xf0] sm:$0xff]
    %v927 = vld [vmem:[%s895 + $0xf8] sm:$0xff]
    %v928 = vrot.slane %v248, 6
    %v929 = vrot.slane %v249, 6
    %932 = vmatprep.subr.mxu0 0.0
    %933 = vmatpush1.msra.mxu0 %v896
    %934 = vmatprep.subr.mxu0 0.0
    %935 = vmatpush1.msra.mxu0 %v897
    %936 = vmatprep.subr.mxu0 0.0
    %937 = vmatpush1.msra.mxu0 %v898
    %938 = vmatprep.subr.mxu0 0.0
    %939 = vmatpush1.msra.mxu0 %v899
    %940 = vmatprep.subr.mxu0 0.0
    %941 = vmatpush1.msra.mxu0 %v900
    %942 = vmatprep.subr.mxu0 0.0
    %943 = vmatpush1.msra.mxu0 %v901
    %944 = vmatprep.subr.mxu0 0.0
    %945 = vmatpush1.msra.mxu0 %v902
    %946 = vmatprep.subr.mxu0 0.0
    %947 = vmatpush1.msra.mxu0 %v903
    %948 = vmatprep.subr.mxu0 0.0
    %949 = vmatpush1.msra.mxu0 %v904
    %950 = vmatprep.subr.mxu0 0.0
    %951 = vmatpush1.msra.mxu0 %v905
    %952 = vmatprep.subr.mxu0 0.0
    %953 = vmatpush1.msra.mxu0 %v906
    %954 = vmatprep.subr.mxu0 0.0
    %955 = vmatpush1.msra.mxu0 %v907
    %956 = vmatprep.subr.mxu0 0.0
    %957 = vmatpush1.msra.mxu0 %v908
    %958 = vmatprep.subr.mxu0 0.0
    %959 = vmatpush1.msra.mxu0 %v909
    %960 = vmatprep.subr.mxu0 0.0
    %961 = vmatpush1.msra.mxu0 %v910
    %962 = vmatprep.subr.mxu0 0.0
    %963 = vmatpush1.msra.mxu0 %v911
    %964 = vmatprep.subr.mxu0 0.0
    %965 = vmatpush1.msra.mxu0 %v912
    %966 = vmatprep.subr.mxu0 0.0
    %967 = vmatpush1.msra.mxu0 %v913
    %968 = vmatprep.subr.mxu0 0.0
    %969 = vmatpush1.msra.mxu0 %v914
    %970 = vmatprep.subr.mxu0 0.0
    %971 = vmatpush1.msra.mxu0 %v915
    %972 = vmatprep.subr.mxu0 0.0
    %973 = vmatpush1.msra.mxu0 %v916
    %974 = vmatprep.subr.mxu0 0.0
    %975 = vmatpush1.msra.mxu0 %v917
    %976 = vmatprep.subr.mxu0 0.0
    %977 = vmatpush1.msra.mxu0 %v918
    %978 = vmatprep.subr.mxu0 0.0
    %979 = vmatpush1.msra.mxu0 %v919
    %980 = vmatprep.subr.mxu0 0.0
    %981 = vmatpush1.msra.mxu0 %v920
    %982 = vmatprep.subr.mxu0 0.0
    %983 = vmatpush1.msra.mxu0 %v921
    %984 = vmatprep.subr.mxu0 0.0
    %985 = vmatpush1.msra.mxu0 %v922
    %986 = vmatprep.subr.mxu0 0.0
    %987 = vmatpush1.msra.mxu0 %v923
    %988 = vmatprep.subr.mxu0 0.0
    %989 = vmatpush1.msra.mxu0 %v924
    %990 = vmatprep.subr.mxu0 0.0
    %991 = vmatpush1.msra.mxu0 %v925
    %992 = vmatprep.subr.mxu0 0.0
    %993 = vmatpush1.msra.mxu0 %v926
    %994 = vmatprep.subr.mxu0 0.0
    %995 = vmatpush1.msra.mxu0 %v927
    %996 = vmatprep.mubr.f32.mxu0 %v929
    %997 = vmatmul.mubr.f32.gmra.mrb[0].mxu0 %v928
    %v998 = vpop.f32.mrb[0].mxu0
    %v999 = vadd.f32 0.0, %v998
    %v1000 = vpop.f32.mrb[0].mxu0
    %1001 = vdwg.mxu0
    %v1002 = vadd.f32 %v894, %v999
    %s1003 = scalar_lea.vmem %s4, 1792
    %v1004 = vld [vmem:[%s1003] sm:$0xff]
    %v1005 = vld [vmem:[%s1003 + $0x8] sm:$0xff]
    %v1006 = vld [vmem:[%s1003 + $0x10] sm:$0xff]
    %v1007 = vld [vmem:[%s1003 + $0x18] sm:$0xff]
    %v1008 = vld [vmem:[%s1003 + $0x20] sm:$0xff]
    %v1009 = vld [vmem:[%s1003 + $0x28] sm:$0xff]
    %v1010 = vld [vmem:[%s1003 + $0x30] sm:$0xff]
    %v1011 = vld [vmem:[%s1003 + $0x38] sm:$0xff]
    %v1012 = vld [vmem:[%s1003 + $0x40] sm:$0xff]
    %v1013 = vld [vmem:[%s1003 + $0x48] sm:$0xff]
    %v1014 = vld [vmem:[%s1003 + $0x50] sm:$0xff]
    %v1015 = vld [vmem:[%s1003 + $0x58] sm:$0xff]
    %v1016 = vld [vmem:[%s1003 + $0x60] sm:$0xff]
    %v1017 = vld [vmem:[%s1003 + $0x68] sm:$0xff]
    %v1018 = vld [vmem:[%s1003 + $0x70] sm:$0xff]
    %v1019 = vld [vmem:[%s1003 + $0x78] sm:$0xff]
    %v1020 = vld [vmem:[%s1003 + $0x80] sm:$0xff]
    %v1021 = vld [vmem:[%s1003 + $0x88] sm:$0xff]
    %v1022 = vld [vmem:[%s1003 + $0x90] sm:$0xff]
    %v1023 = vld [vmem:[%s1003 + $0x98] sm:$0xff]
    %v1024 = vld [vmem:[%s1003 + $0xa0] sm:$0xff]
    %v1025 = vld [vmem:[%s1003 + $0xa8] sm:$0xff]
    %v1026 = vld [vmem:[%s1003 + $0xb0] sm:$0xff]
    %v1027 = vld [vmem:[%s1003 + $0xb8] sm:$0xff]
    %v1028 = vld [vmem:[%s1003 + $0xc0] sm:$0xff]
    %v1029 = vld [vmem:[%s1003 + $0xc8] sm:$0xff]
    %v1030 = vld [vmem:[%s1003 + $0xd0] sm:$0xff]
    %v1031 = vld [vmem:[%s1003 + $0xd8] sm:$0xff]
    %v1032 = vld [vmem:[%s1003 + $0xe0] sm:$0xff]
    %v1033 = vld [vmem:[%s1003 + $0xe8] sm:$0xff]
    %v1034 = vld [vmem:[%s1003 + $0xf0] sm:$0xff]
    %v1035 = vld [vmem:[%s1003 + $0xf8] sm:$0xff]
    %v1036 = vrot.slane %v248, 7
    %v1037 = vrot.slane %v249, 7
    %1040 = vmatprep.subr.mxu0 0.0
    %1041 = vmatpush1.msra.mxu0 %v1004
    %1042 = vmatprep.subr.mxu0 0.0
    %1043 = vmatpush1.msra.mxu0 %v1005
    %1044 = vmatprep.subr.mxu0 0.0
    %1045 = vmatpush1.msra.mxu0 %v1006
    %1046 = vmatprep.subr.mxu0 0.0
    %1047 = vmatpush1.msra.mxu0 %v1007
    %1048 = vmatprep.subr.mxu0 0.0
    %1049 = vmatpush1.msra.mxu0 %v1008
    %1050 = vmatprep.subr.mxu0 0.0
    %1051 = vmatpush1.msra.mxu0 %v1009
    %1052 = vmatprep.subr.mxu0 0.0
    %1053 = vmatpush1.msra.mxu0 %v1010
    %1054 = vmatprep.subr.mxu0 0.0
    %1055 = vmatpush1.msra.mxu0 %v1011
    %1056 = vmatprep.subr.mxu0 0.0
    %1057 = vmatpush1.msra.mxu0 %v1012
    %1058 = vmatprep.subr.mxu0 0.0
    %1059 = vmatpush1.msra.mxu0 %v1013
    %1060 = vmatprep.subr.mxu0 0.0
    %1061 = vmatpush1.msra.mxu0 %v1014
    %1062 = vmatprep.subr.mxu0 0.0
    %1063 = vmatpush1.msra.mxu0 %v1015
    %1064 = vmatprep.subr.mxu0 0.0
    %1065 = vmatpush1.msra.mxu0 %v1016
    %1066 = vmatprep.subr.mxu0 0.0
    %1067 = vmatpush1.msra.mxu0 %v1017
    %1068 = vmatprep.subr.mxu0 0.0
    %1069 = vmatpush1.msra.mxu0 %v1018
    %1070 = vmatprep.subr.mxu0 0.0
    %1071 = vmatpush1.msra.mxu0 %v1019
    %1072 = vmatprep.subr.mxu0 0.0
    %1073 = vmatpush1.msra.mxu0 %v1020
    %1074 = vmatprep.subr.mxu0 0.0
    %1075 = vmatpush1.msra.mxu0 %v1021
    %1076 = vmatprep.subr.mxu0 0.0
    %1077 = vmatpush1.msra.mxu0 %v1022
    %1078 = vmatprep.subr.mxu0 0.0
    %1079 = vmatpush1.msra.mxu0 %v1023
    %1080 = vmatprep.subr.mxu0 0.0
    %1081 = vmatpush1.msra.mxu0 %v1024
    %1082 = vmatprep.subr.mxu0 0.0
    %1083 = vmatpush1.msra.mxu0 %v1025
    %1084 = vmatprep.subr.mxu0 0.0
    %1085 = vmatpush1.msra.mxu0 %v1026
    %1086 = vmatprep.subr.mxu0 0.0
    %1087 = vmatpush1.msra.mxu0 %v1027
    %1088 = vmatprep.subr.mxu0 0.0
    %1089 = vmatpush1.msra.mxu0 %v1028
    %1090 = vmatprep.subr.mxu0 0.0
    %1091 = vmatpush1.msra.mxu0 %v1029
    %1092 = vmatprep.subr.mxu0 0.0
    %1093 = vmatpush1.msra.mxu0 %v1030
    %1094 = vmatprep.subr.mxu0 0.0
    %1095 = vmatpush1.msra.mxu0 %v1031
    %1096 = vmatprep.subr.mxu0 0.0
    %1097 = vmatpush1.msra.mxu0 %v1032
    %1098 = vmatprep.subr.mxu0 0.0
    %1099 = vmatpush1.msra.mxu0 %v1033
    %1100 = vmatprep.subr.mxu0 0.0
    %1101 = vmatpush1.msra.mxu0 %v1034
    %1102 = vmatprep.subr.mxu0 0.0
    %1103 = vmatpush1.msra.mxu0 %v1035
    %1104 = vmatprep.mubr.f32.mxu0 %v1037
    %1105 = vmatmul.mubr.f32.gmra.mrb[0].mxu0 %v1036
    %v1106 = vpop.f32.mrb[0].mxu0
    %v1107 = vadd.f32 0.0, %v1106
    %v1108 = vpop.f32.mrb[0].mxu0
    %1109 = vdwg.mxu0
    %v1110 = vadd.f32 %v1002, %v1107
    %v1111 = vld [vmem:[%s5] sm:$0x1]
    %v1112 = vadd.f32 %v1110, %v1111
    %vm1113 = vcmask 73728
    %1114 = vst.msk [vmem:[#allocation2] sm:$0x1] %vm1113, %v1112
    %v1115 = vld [vmem:[%s4] sm:$0xff]
    %v1116 = vld [vmem:[%s4 + $0x8] sm:$0xff]
    %v1117 = vld [vmem:[%s4 + $0x10] sm:$0xff]
    %v1118 = vld [vmem:[%s4 + $0x18] sm:$0xff]
    %v1119 = vld [vmem:[%s4 + $0x20] sm:$0xff]
    %v1120 = vld [vmem:[%s4 + $0x28] sm:$0xff]
    %v1121 = vld [vmem:[%s4 + $0x30] sm:$0xff]
    %v1122 = vld [vmem:[%s4 + $0x38] sm:$0xff]
    %v1123 = vld [vmem:[%s4 + $0x40] sm:$0xff]
    %v1124 = vld [vmem:[%s4 + $0x48] sm:$0xff]
    %v1125 = vld [vmem:[%s4 + $0x50] sm:$0xff]
    %v1126 = vld [vmem:[%s4 + $0x58] sm:$0xff]
    %v1127 = vld [vmem:[%s4 + $0x60] sm:$0xff]
    %v1128 = vld [vmem:[%s4 + $0x68] sm:$0xff]
    %v1129 = vld [vmem:[%s4 + $0x70] sm:$0xff]
    %v1130 = vld [vmem:[%s4 + $0x78] sm:$0xff]
    %v1131 = vld [vmem:[%s4 + $0x80] sm:$0xff]
    %v1132 = vld [vmem:[%s4 + $0x88] sm:$0xff]
    %v1133 = vld [vmem:[%s4 + $0x90] sm:$0xff]
    %v1134 = vld [vmem:[%s4 + $0x98] sm:$0xff]
    %v1135 = vld [vmem:[%s4 + $0xa0] sm:$0xff]
    %v1136 = vld [vmem:[%s4 + $0xa8] sm:$0xff]
    %v1137 = vld [vmem:[%s4 + $0xb0] sm:$0xff]
    %v1138 = vld [vmem:[%s4 + $0xb8] sm:$0xff]
    %v1139 = vld [vmem:[%s4 + $0xc0] sm:$0xff]
    %v1140 = vld [vmem:[%s4 + $0xc8] sm:$0xff]
    %v1141 = vld [vmem:[%s4 + $0xd0] sm:$0xff]
    %v1142 = vld [vmem:[%s4 + $0xd8] sm:$0xff]
    %v1143 = vld [vmem:[%s4 + $0xe0] sm:$0xff]
    %v1144 = vld [vmem:[%s4 + $0xe8] sm:$0xff]
    %v1145 = vld [vmem:[%s4 + $0xf0] sm:$0xff]
    %v1146 = vld [vmem:[%s4 + $0xf8] sm:$0xff]
    %v1147 = vld [vmem:[%s284] sm:$0xff]
    %v1148 = vld [vmem:[%s284 + $0x8] sm:$0xff]
    %v1149 = vld [vmem:[%s284 + $0x10] sm:$0xff]
    %v1150 = vld [vmem:[%s284 + $0x18] sm:$0xff]
    %v1151 = vld [vmem:[%s284 + $0x20] sm:$0xff]
    %v1152 = vld [vmem:[%s284 + $0x28] sm:$0xff]
    %v1153 = vld [vmem:[%s284 + $0x30] sm:$0xff]
    %v1154 = vld [vmem:[%s284 + $0x38] sm:$0xff]
    %v1155 = vld [vmem:[%s284 + $0x40] sm:$0xff]
    %v1156 = vld [vmem:[%s284 + $0x48] sm:$0xff]
    %v1157 = vld [vmem:[%s284 + $0x50] sm:$0xff]
    %v1158 = vld [vmem:[%s284 + $0x58] sm:$0xff]
    %v1159 = vld [vmem:[%s284 + $0x60] sm:$0xff]
    %v1160 = vld [vmem:[%s284 + $0x68] sm:$0xff]
    %v1161 = vld [vmem:[%s284 + $0x70] sm:$0xff]
    %v1162 = vld [vmem:[%s284 + $0x78] sm:$0xff]
    %v1163 = vld [vmem:[%s284 + $0x80] sm:$0xff]
    %v1164 = vld [vmem:[%s284 + $0x88] sm:$0xff]
    %v1165 = vld [vmem:[%s284 + $0x90] sm:$0xff]
    %v1166 = vld [vmem:[%s284 + $0x98] sm:$0xff]
    %v1167 = vld [vmem:[%s284 + $0xa0] sm:$0xff]
    %v1168 = vld [vmem:[%s284 + $0xa8] sm:$0xff]
    %v1169 = vld [vmem:[%s284 + $0xb0] sm:$0xff]
    %v1170 = vld [vmem:[%s284 + $0xb8] sm:$0xff]
    %v1171 = vld [vmem:[%s284 + $0xc0] sm:$0xff]
    %v1172 = vld [vmem:[%s284 + $0xc8] sm:$0xff]
    %v1173 = vld [vmem:[%s284 + $0xd0] sm:$0xff]
    %v1174 = vld [vmem:[%s284 + $0xd8] sm:$0xff]
    %v1175 = vld [vmem:[%s284 + $0xe0] sm:$0xff]
    %v1176 = vld [vmem:[%s284 + $0xe8] sm:$0xff]
    %v1177 = vld [vmem:[%s284 + $0xf0] sm:$0xff]
    %v1178 = vld [vmem:[%s284 + $0xf8] sm:$0xff]
    %v1181 = vrot.slane %v250, 1
    %v1182 = vrot.slane %v251, 1
    %1185 = vmatprep.subr.mxu0 0.0
    %1186 = vmatpush1.msra.mxu0 %v1147
    %1187 = vmatprep.subr.mxu0 0.0
    %1188 = vmatpush1.msra.mxu0 %v1148
    %1189 = vmatprep.subr.mxu0 0.0
    %1190 = vmatpush1.msra.mxu0 %v1149
    %1191 = vmatprep.subr.mxu0 0.0
    %1192 = vmatpush1.msra.mxu0 %v1150
    %1193 = vmatprep.subr.mxu0 0.0
    %1194 = vmatpush1.msra.mxu0 %v1151
    %1195 = vmatprep.subr.mxu0 0.0
    %1196 = vmatpush1.msra.mxu0 %v1152
    %1197 = vmatprep.subr.mxu0 0.0
    %1198 = vmatpush1.msra.mxu0 %v1153
    %1199 = vmatprep.subr.mxu0 0.0
    %1200 = vmatpush1.msra.mxu0 %v1154
    %1201 = vmatprep.subr.mxu0 0.0
    %1202 = vmatpush1.msra.mxu0 %v1155
    %1203 = vmatprep.subr.mxu0 0.0
    %1204 = vmatpush1.msra.mxu0 %v1156
    %1205 = vmatprep.subr.mxu0 0.0
    %1206 = vmatpush1.msra.mxu0 %v1157
    %1207 = vmatprep.subr.mxu0 0.0
    %1208 = vmatpush1.msra.mxu0 %v1158
    %1209 = vmatprep.subr.mxu0 0.0
    %1210 = vmatpush1.msra.mxu0 %v1159
    %1211 = vmatprep.subr.mxu0 0.0
    %1212 = vmatpush1.msra.mxu0 %v1160
    %1213 = vmatprep.subr.mxu0 0.0
    %1214 = vmatpush1.msra.mxu0 %v1161
    %1215 = vmatprep.subr.mxu0 0.0
    %1216 = vmatpush1.msra.mxu0 %v1162
    %1217 = vmatprep.subr.mxu0 0.0
    %1218 = vmatpush1.msra.mxu0 %v1163
    %1219 = vmatprep.subr.mxu0 0.0
    %1220 = vmatpush1.msra.mxu0 %v1164
    %1221 = vmatprep.subr.mxu0 0.0
    %1222 = vmatpush1.msra.mxu0 %v1165
    %1223 = vmatprep.subr.mxu0 0.0
    %1224 = vmatpush1.msra.mxu0 %v1166
    %1225 = vmatprep.subr.mxu0 0.0
    %1226 = vmatpush1.msra.mxu0 %v1167
    %1227 = vmatprep.subr.mxu0 0.0
    %1228 = vmatpush1.msra.mxu0 %v1168
    %1229 = vmatprep.subr.mxu0 0.0
    %1230 = vmatpush1.msra.mxu0 %v1169
    %1231 = vmatprep.subr.mxu0 0.0
    %1232 = vmatpush1.msra.mxu0 %v1170
    %1233 = vmatprep.subr.mxu0 0.0
    %1234 = vmatpush1.msra.mxu0 %v1171
    %1235 = vmatprep.subr.mxu0 0.0
    %1236 = vmatpush1.msra.mxu0 %v1172
    %1237 = vmatprep.subr.mxu0 0.0
    %1238 = vmatpush1.msra.mxu0 %v1173
    %1239 = vmatprep.subr.mxu0 0.0
    %1240 = vmatpush1.msra.mxu0 %v1174
    %1241 = vmatprep.subr.mxu0 0.0
    %1242 = vmatpush1.msra.mxu0 %v1175
    %1243 = vmatprep.subr.mxu0 0.0
    %1244 = vmatpush1.msra.mxu0 %v1176
    %1245 = vmatprep.subr.mxu0 0.0
    %1246 = vmatpush1.msra.mxu0 %v1177
    %1247 = vmatprep.subr.mxu0 0.0
    %1248 = vmatpush1.msra.mxu0 %v1178
    %1249 = vmatprep.mubr.f32.mxu0 %v1182
    %1250 = vmatmul.mubr.f32.gmra.mrb[0].mxu0 %v1181
    %v1251 = vpop.f32.mrb[0].mxu0
    %v1252 = vadd.f32 0.0, %v1251
    %v1253 = vpop.f32.mrb[0].mxu0
    %1254 = vdwg.mxu0
    %1255 = vmatprep.subr.mxu0 0.0
    %1256 = vmatpush1.msra.mxu0 %v1115
    %1257 = vmatprep.subr.mxu0 0.0
    %1258 = vmatpush1.msra.mxu0 %v1116
    %1259 = vmatprep.subr.mxu0 0.0
    %1260 = vmatpush1.msra.mxu0 %v1117
    %1261 = vmatprep.subr.mxu0 0.0
    %1262 = vmatpush1.msra.mxu0 %v1118
    %1263 = vmatprep.subr.mxu0 0.0
    %1264 = vmatpush1.msra.mxu0 %v1119
    %1265 = vmatprep.subr.mxu0 0.0
    %1266 = vmatpush1.msra.mxu0 %v1120
    %1267 = vmatprep.subr.mxu0 0.0
    %1268 = vmatpush1.msra.mxu0 %v1121
    %1269 = vmatprep.subr.mxu0 0.0
    %1270 = vmatpush1.msra.mxu0 %v1122
    %1271 = vmatprep.subr.mxu0 0.0
    %1272 = vmatpush1.msra.mxu0 %v1123
    %1273 = vmatprep.subr.mxu0 0.0
    %1274 = vmatpush1.msra.mxu0 %v1124
    %1275 = vmatprep.subr.mxu0 0.0
    %1276 = vmatpush1.msra.mxu0 %v1125
    %1277 = vmatprep.subr.mxu0 0.0
    %1278 = vmatpush1.msra.mxu0 %v1126
    %1279 = vmatprep.subr.mxu0 0.0
    %1280 = vmatpush1.msra.mxu0 %v1127
    %1281 = vmatprep.subr.mxu0 0.0
    %1282 = vmatpush1.msra.mxu0 %v1128
    %1283 = vmatprep.subr.mxu0 0.0
    %1284 = vmatpush1.msra.mxu0 %v1129
    %1285 = vmatprep.subr.mxu0 0.0
    %1286 = vmatpush1.msra.mxu0 %v1130
    %1287 = vmatprep.subr.mxu0 0.0
    %1288 = vmatpush1.msra.mxu0 %v1131
    %1289 = vmatprep.subr.mxu0 0.0
    %1290 = vmatpush1.msra.mxu0 %v1132
    %1291 = vmatprep.subr.mxu0 0.0
    %1292 = vmatpush1.msra.mxu0 %v1133
    %1293 = vmatprep.subr.mxu0 0.0
    %1294 = vmatpush1.msra.mxu0 %v1134
    %1295 = vmatprep.subr.mxu0 0.0
    %1296 = vmatpush1.msra.mxu0 %v1135
    %1297 = vmatprep.subr.mxu0 0.0
    %1298 = vmatpush1.msra.mxu0 %v1136
    %1299 = vmatprep.subr.mxu0 0.0
    %1300 = vmatpush1.msra.mxu0 %v1137
    %1301 = vmatprep.subr.mxu0 0.0
    %1302 = vmatpush1.msra.mxu0 %v1138
    %1303 = vmatprep.subr.mxu0 0.0
    %1304 = vmatpush1.msra.mxu0 %v1139
    %1305 = vmatprep.subr.mxu0 0.0
    %1306 = vmatpush1.msra.mxu0 %v1140
    %1307 = vmatprep.subr.mxu0 0.0
    %1308 = vmatpush1.msra.mxu0 %v1141
    %1309 = vmatprep.subr.mxu0 0.0
    %1310 = vmatpush1.msra.mxu0 %v1142
    %1311 = vmatprep.subr.mxu0 0.0
    %1312 = vmatpush1.msra.mxu0 %v1143
    %1313 = vmatprep.subr.mxu0 0.0
    %1314 = vmatpush1.msra.mxu0 %v1144
    %1315 = vmatprep.subr.mxu0 0.0
    %1316 = vmatpush1.msra.mxu0 %v1145
    %1317 = vmatprep.subr.mxu0 0.0
    %1318 = vmatpush1.msra.mxu0 %v1146
    %1319 = vmatprep.mubr.f32.mxu0 %v251
    %1320 = vmatmul.mubr.f32.gmra.mrb[0].mxu0 %v250
    %v1321 = vpop.f32.mrb[0].mxu0
    %v1322 = vadd.f32 %v1252, %v1321
    %v1323 = vpop.f32.mrb[0].mxu0
    %1324 = vdwg.mxu0
    %v1325 = vld [vmem:[%s463] sm:$0xff]
    %v1326 = vld [vmem:[%s463 + $0x8] sm:$0xff]
    %v1327 = vld [vmem:[%s463 + $0x10] sm:$0xff]
    %v1328 = vld [vmem:[%s463 + $0x18] sm:$0xff]
    %v1329 = vld [vmem:[%s463 + $0x20] sm:$0xff]
    %v1330 = vld [vmem:[%s463 + $0x28] sm:$0xff]
    %v1331 = vld [vmem:[%s463 + $0x30] sm:$0xff]
    %v1332 = vld [vmem:[%s463 + $0x38] sm:$0xff]
    %v1333 = vld [vmem:[%s463 + $0x40] sm:$0xff]
    %v1334 = vld [vmem:[%s463 + $0x48] sm:$0xff]
    %v1335 = vld [vmem:[%s463 + $0x50] sm:$0xff]
    %v1336 = vld [vmem:[%s463 + $0x58] sm:$0xff]
    %v1337 = vld [vmem:[%s463 + $0x60] sm:$0xff]
    %v1338 = vld [vmem:[%s463 + $0x68] sm:$0xff]
    %v1339 = vld [vmem:[%s463 + $0x70] sm:$0xff]
    %v1340 = vld [vmem:[%s463 + $0x78] sm:$0xff]
    %v1341 = vld [vmem:[%s463 + $0x80] sm:$0xff]
    %v1342 = vld [vmem:[%s463 + $0x88] sm:$0xff]
    %v1343 = vld [vmem:[%s463 + $0x90] sm:$0xff]
    %v1344 = vld [vmem:[%s463 + $0x98] sm:$0xff]
    %v1345 = vld [vmem:[%s463 + $0xa0] sm:$0xff]
    %v1346 = vld [vmem:[%s463 + $0xa8] sm:$0xff]
    %v1347 = vld [vmem:[%s463 + $0xb0] sm:$0xff]
    %v1348 = vld [vmem:[%s463 + $0xb8] sm:$0xff]
    %v1349 = vld [vmem:[%s463 + $0xc0] sm:$0xff]
    %v1350 = vld [vmem:[%s463 + $0xc8] sm:$0xff]
    %v1351 = vld [vmem:[%s463 + $0xd0] sm:$0xff]
    %v1352 = vld [vmem:[%s463 + $0xd8] sm:$0xff]
    %v1353 = vld [vmem:[%s463 + $0xe0] sm:$0xff]
    %v1354 = vld [vmem:[%s463 + $0xe8] sm:$0xff]
    %v1355 = vld [vmem:[%s463 + $0xf0] sm:$0xff]
    %v1356 = vld [vmem:[%s463 + $0xf8] sm:$0xff]
    %v1357 = vrot.slane %v250, 2
    %v1358 = vrot.slane %v251, 2
    %1361 = vmatprep.subr.mxu0 0.0
    %1362 = vmatpush1.msra.mxu0 %v1325
    %1363 = vmatprep.subr.mxu0 0.0
    %1364 = vmatpush1.msra.mxu0 %v1326
    %1365 = vmatprep.subr.mxu0 0.0
    %1366 = vmatpush1.msra.mxu0 %v1327
    %1367 = vmatprep.subr.mxu0 0.0
    %1368 = vmatpush1.msra.mxu0 %v1328
    %1369 = vmatprep.subr.mxu0 0.0
    %1370 = vmatpush1.msra.mxu0 %v1329
    %1371 = vmatprep.subr.mxu0 0.0
    %1372 = vmatpush1.msra.mxu0 %v1330
    %1373 = vmatprep.subr.mxu0 0.0
    %1374 = vmatpush1.msra.mxu0 %v1331
    %1375 = vmatprep.subr.mxu0 0.0
    %1376 = vmatpush1.msra.mxu0 %v1332
    %1377 = vmatprep.subr.mxu0 0.0
    %1378 = vmatpush1.msra.mxu0 %v1333
    %1379 = vmatprep.subr.mxu0 0.0
    %1380 = vmatpush1.msra.mxu0 %v1334
    %1381 = vmatprep.subr.mxu0 0.0
    %1382 = vmatpush1.msra.mxu0 %v1335
    %1383 = vmatprep.subr.mxu0 0.0
    %1384 = vmatpush1.msra.mxu0 %v1336
    %1385 = vmatprep.subr.mxu0 0.0
    %1386 = vmatpush1.msra.mxu0 %v1337
    %1387 = vmatprep.subr.mxu0 0.0
    %1388 = vmatpush1.msra.mxu0 %v1338
    %1389 = vmatprep.subr.mxu0 0.0
    %1390 = vmatpush1.msra.mxu0 %v1339
    %1391 = vmatprep.subr.mxu0 0.0
    %1392 = vmatpush1.msra.mxu0 %v1340
    %1393 = vmatprep.subr.mxu0 0.0
    %1394 = vmatpush1.msra.mxu0 %v1341
    %1395 = vmatprep.subr.mxu0 0.0
    %1396 = vmatpush1.msra.mxu0 %v1342
    %1397 = vmatprep.subr.mxu0 0.0
    %1398 = vmatpush1.msra.mxu0 %v1343
    %1399 = vmatprep.subr.mxu0 0.0
    %1400 = vmatpush1.msra.mxu0 %v1344
    %1401 = vmatprep.subr.mxu0 0.0
    %1402 = vmatpush1.msra.mxu0 %v1345
    %1403 = vmatprep.subr.mxu0 0.0
    %1404 = vmatpush1.msra.mxu0 %v1346
    %1405 = vmatprep.subr.mxu0 0.0
    %1406 = vmatpush1.msra.mxu0 %v1347
    %1407 = vmatprep.subr.mxu0 0.0
    %1408 = vmatpush1.msra.mxu0 %v1348
    %1409 = vmatprep.subr.mxu0 0.0
    %1410 = vmatpush1.msra.mxu0 %v1349
    %1411 = vmatprep.subr.mxu0 0.0
    %1412 = vmatpush1.msra.mxu0 %v1350
    %1413 = vmatprep.subr.mxu0 0.0
    %1414 = vmatpush1.msra.mxu0 %v1351
    %1415 = vmatprep.subr.mxu0 0.0
    %1416 = vmatpush1.msra.mxu0 %v1352
    %1417 = vmatprep.subr.mxu0 0.0
    %1418 = vmatpush1.msra.mxu0 %v1353
    %1419 = vmatprep.subr.mxu0 0.0
    %1420 = vmatpush1.msra.mxu0 %v1354
    %1421 = vmatprep.subr.mxu0 0.0
    %1422 = vmatpush1.msra.mxu0 %v1355
    %1423 = vmatprep.subr.mxu0 0.0
    %1424 = vmatpush1.msra.mxu0 %v1356
    %1425 = vmatprep.mubr.f32.mxu0 %v1358
    %1426 = vmatmul.mubr.f32.gmra.mrb[0].mxu0 %v1357
    %v1427 = vpop.f32.mrb[0].mxu0
    %v1428 = vadd.f32 0.0, %v1427
    %v1429 = vpop.f32.mrb[0].mxu0
    %1430 = vdwg.mxu0
    %v1431 = vadd.f32 %v1322, %v1428
    %v1432 = vld [vmem:[%s571] sm:$0xff]
    %v1433 = vld [vmem:[%s571 + $0x8] sm:$0xff]
    %v1434 = vld [vmem:[%s571 + $0x10] sm:$0xff]
    %v1435 = vld [vmem:[%s571 + $0x18] sm:$0xff]
    %v1436 = vld [vmem:[%s571 + $0x20] sm:$0xff]
    %v1437 = vld [vmem:[%s571 + $0x28] sm:$0xff]
    %v1438 = vld [vmem:[%s571 + $0x30] sm:$0xff]
    %v1439 = vld [vmem:[%s571 + $0x38] sm:$0xff]
    %v1440 = vld [vmem:[%s571 + $0x40] sm:$0xff]
    %v1441 = vld [vmem:[%s571 + $0x48] sm:$0xff]
    %v1442 = vld [vmem:[%s571 + $0x50] sm:$0xff]
    %v1443 = vld [vmem:[%s571 + $0x58] sm:$0xff]
    %v1444 = vld [vmem:[%s571 + $0x60] sm:$0xff]
    %v1445 = vld [vmem:[%s571 + $0x68] sm:$0xff]
    %v1446 = vld [vmem:[%s571 + $0x70] sm:$0xff]
    %v1447 = vld [vmem:[%s571 + $0x78] sm:$0xff]
    %v1448 = vld [vmem:[%s571 + $0x80] sm:$0xff]
    %v1449 = vld [vmem:[%s571 + $0x88] sm:$0xff]
    %v1450 = vld [vmem:[%s571 + $0x90] sm:$0xff]
    %v1451 = vld [vmem:[%s571 + $0x98] sm:$0xff]
    %v1452 = vld [vmem:[%s571 + $0xa0] sm:$0xff]
    %v1453 = vld [vmem:[%s571 + $0xa8] sm:$0xff]
    %v1454 = vld [vmem:[%s571 + $0xb0] sm:$0xff]
    %v1455 = vld [vmem:[%s571 + $0xb8] sm:$0xff]
    %v1456 = vld [vmem:[%s571 + $0xc0] sm:$0xff]
    %v1457 = vld [vmem:[%s571 + $0xc8] sm:$0xff]
    %v1458 = vld [vmem:[%s571 + $0xd0] sm:$0xff]
    %v1459 = vld [vmem:[%s571 + $0xd8] sm:$0xff]
    %v1460 = vld [vmem:[%s571 + $0xe0] sm:$0xff]
    %v1461 = vld [vmem:[%s571 + $0xe8] sm:$0xff]
    %v1462 = vld [vmem:[%s571 + $0xf0] sm:$0xff]
    %v1463 = vld [vmem:[%s571 + $0xf8] sm:$0xff]
    %v1464 = vrot.slane %v250, 3
    %v1465 = vrot.slane %v251, 3
    %1468 = vmatprep.subr.mxu0 0.0
    %1469 = vmatpush1.msra.mxu0 %v1432
    %1470 = vmatprep.subr.mxu0 0.0
    %1471 = vmatpush1.msra.mxu0 %v1433
    %1472 = vmatprep.subr.mxu0 0.0
    %1473 = vmatpush1.msra.mxu0 %v1434
    %1474 = vmatprep.subr.mxu0 0.0
    %1475 = vmatpush1.msra.mxu0 %v1435
    %1476 = vmatprep.subr.mxu0 0.0
    %1477 = vmatpush1.msra.mxu0 %v1436
    %1478 = vmatprep.subr.mxu0 0.0
    %1479 = vmatpush1.msra.mxu0 %v1437
    %1480 = vmatprep.subr.mxu0 0.0
    %1481 = vmatpush1.msra.mxu0 %v1438
    %1482 = vmatprep.subr.mxu0 0.0
    %1483 = vmatpush1.msra.mxu0 %v1439
    %1484 = vmatprep.subr.mxu0 0.0
    %1485 = vmatpush1.msra.mxu0 %v1440
    %1486 = vmatprep.subr.mxu0 0.0
    %1487 = vmatpush1.msra.mxu0 %v1441
    %1488 = vmatprep.subr.mxu0 0.0
    %1489 = vmatpush1.msra.mxu0 %v1442
    %1490 = vmatprep.subr.mxu0 0.0
    %1491 = vmatpush1.msra.mxu0 %v1443
    %1492 = vmatprep.subr.mxu0 0.0
    %1493 = vmatpush1.msra.mxu0 %v1444
    %1494 = vmatprep.subr.mxu0 0.0
    %1495 = vmatpush1.msra.mxu0 %v1445
    %1496 = vmatprep.subr.mxu0 0.0
    %1497 = vmatpush1.msra.mxu0 %v1446
    %1498 = vmatprep.subr.mxu0 0.0
    %1499 = vmatpush1.msra.mxu0 %v1447
    %1500 = vmatprep.subr.mxu0 0.0
    %1501 = vmatpush1.msra.mxu0 %v1448
    %1502 = vmatprep.subr.mxu0 0.0
    %1503 = vmatpush1.msra.mxu0 %v1449
    %1504 = vmatprep.subr.mxu0 0.0
    %1505 = vmatpush1.msra.mxu0 %v1450
    %1506 = vmatprep.subr.mxu0 0.0
    %1507 = vmatpush1.msra.mxu0 %v1451
    %1508 = vmatprep.subr.mxu0 0.0
    %1509 = vmatpush1.msra.mxu0 %v1452
    %1510 = vmatprep.subr.mxu0 0.0
    %1511 = vmatpush1.msra.mxu0 %v1453
    %1512 = vmatprep.subr.mxu0 0.0
    %1513 = vmatpush1.msra.mxu0 %v1454
    %1514 = vmatprep.subr.mxu0 0.0
    %1515 = vmatpush1.msra.mxu0 %v1455
    %1516 = vmatprep.subr.mxu0 0.0
    %1517 = vmatpush1.msra.mxu0 %v1456
    %1518 = vmatprep.subr.mxu0 0.0
    %1519 = vmatpush1.msra.mxu0 %v1457
    %1520 = vmatprep.subr.mxu0 0.0
    %1521 = vmatpush1.msra.mxu0 %v1458
    %1522 = vmatprep.subr.mxu0 0.0
    %1523 = vmatpush1.msra.mxu0 %v1459
    %1524 = vmatprep.subr.mxu0 0.0
    %1525 = vmatpush1.msra.mxu0 %v1460
    %1526 = vmatprep.subr.mxu0 0.0
    %1527 = vmatpush1.msra.mxu0 %v1461
    %1528 = vmatprep.subr.mxu0 0.0
    %1529 = vmatpush1.msra.mxu0 %v1462
    %1530 = vmatprep.subr.mxu0 0.0
    %1531 = vmatpush1.msra.mxu0 %v1463
    %1532 = vmatprep.mubr.f32.mxu0 %v1465
    %1533 = vmatmul.mubr.f32.gmra.mrb[0].mxu0 %v1464
    %v1534 = vpop.f32.mrb[0].mxu0
    %v1535 = vadd.f32 0.0, %v1534
    %v1536 = vpop.f32.mrb[0].mxu0
    %1537 = vdwg.mxu0
    %v1538 = vadd.f32 %v1431, %v1535
    %v1539 = vld [vmem:[%s679] sm:$0xff]
    %v1540 = vld [vmem:[%s679 + $0x8] sm:$0xff]
    %v1541 = vld [vmem:[%s679 + $0x10] sm:$0xff]
    %v1542 = vld [vmem:[%s679 + $0x18] sm:$0xff]
    %v1543 = vld [vmem:[%s679 + $0x20] sm:$0xff]
    %v1544 = vld [vmem:[%s679 + $0x28] sm:$0xff]
    %v1545 = vld [vmem:[%s679 + $0x30] sm:$0xff]
    %v1546 = vld [vmem:[%s679 + $0x38] sm:$0xff]
    %v1547 = vld [vmem:[%s679 + $0x40] sm:$0xff]
    %v1548 = vld [vmem:[%s679 + $0x48] sm:$0xff]
    %v1549 = vld [vmem:[%s679 + $0x50] sm:$0xff]
    %v1550 = vld [vmem:[%s679 + $0x58] sm:$0xff]
    %v1551 = vld [vmem:[%s679 + $0x60] sm:$0xff]
    %v1552 = vld [vmem:[%s679 + $0x68] sm:$0xff]
    %v1553 = vld [vmem:[%s679 + $0x70] sm:$0xff]
    %v1554 = vld [vmem:[%s679 + $0x78] sm:$0xff]
    %v1555 = vld [vmem:[%s679 + $0x80] sm:$0xff]
    %v1556 = vld [vmem:[%s679 + $0x88] sm:$0xff]
    %v1557 = vld [vmem:[%s679 + $0x90] sm:$0xff]
    %v1558 = vld [vmem:[%s679 + $0x98] sm:$0xff]
    %v1559 = vld [vmem:[%s679 + $0xa0] sm:$0xff]
    %v1560 = vld [vmem:[%s679 + $0xa8] sm:$0xff]
    %v1561 = vld [vmem:[%s679 + $0xb0] sm:$0xff]
    %v1562 = vld [vmem:[%s679 + $0xb8] sm:$0xff]
    %v1563 = vld [vmem:[%s679 + $0xc0] sm:$0xff]
    %v1564 = vld [vmem:[%s679 + $0xc8] sm:$0xff]
    %v1565 = vld [vmem:[%s679 + $0xd0] sm:$0xff]
    %v1566 = vld [vmem:[%s679 + $0xd8] sm:$0xff]
    %v1567 = vld [vmem:[%s679 + $0xe0] sm:$0xff]
    %v1568 = vld [vmem:[%s679 + $0xe8] sm:$0xff]
    %v1569 = vld [vmem:[%s679 + $0xf0] sm:$0xff]
    %v1570 = vld [vmem:[%s679 + $0xf8] sm:$0xff]
    %v1571 = vrot.slane %v250, 4
    %v1572 = vrot.slane %v251, 4
    %1575 = vmatprep.subr.mxu0 0.0
    %1576 = vmatpush1.msra.mxu0 %v1539
    %1577 = vmatprep.subr.mxu0 0.0
    %1578 = vmatpush1.msra.mxu0 %v1540
    %1579 = vmatprep.subr.mxu0 0.0
    %1580 = vmatpush1.msra.mxu0 %v1541
    %1581 = vmatprep.subr.mxu0 0.0
    %1582 = vmatpush1.msra.mxu0 %v1542
    %1583 = vmatprep.subr.mxu0 0.0
    %1584 = vmatpush1.msra.mxu0 %v1543
    %1585 = vmatprep.subr.mxu0 0.0
    %1586 = vmatpush1.msra.mxu0 %v1544
    %1587 = vmatprep.subr.mxu0 0.0
    %1588 = vmatpush1.msra.mxu0 %v1545
    %1589 = vmatprep.subr.mxu0 0.0
    %1590 = vmatpush1.msra.mxu0 %v1546
    %1591 = vmatprep.subr.mxu0 0.0
    %1592 = vmatpush1.msra.mxu0 %v1547
    %1593 = vmatprep.subr.mxu0 0.0
    %1594 = vmatpush1.msra.mxu0 %v1548
    %1595 = vmatprep.subr.mxu0 0.0
    %1596 = vmatpush1.msra.mxu0 %v1549
    %1597 = vmatprep.subr.mxu0 0.0
    %1598 = vmatpush1.msra.mxu0 %v1550
    %1599 = vmatprep.subr.mxu0 0.0
    %1600 = vmatpush1.msra.mxu0 %v1551
    %1601 = vmatprep.subr.mxu0 0.0
    %1602 = vmatpush1.msra.mxu0 %v1552
    %1603 = vmatprep.subr.mxu0 0.0
    %1604 = vmatpush1.msra.mxu0 %v1553
    %1605 = vmatprep.subr.mxu0 0.0
    %1606 = vmatpush1.msra.mxu0 %v1554
    %1607 = vmatprep.subr.mxu0 0.0
    %1608 = vmatpush1.msra.mxu0 %v1555
    %1609 = vmatprep.subr.mxu0 0.0
    %1610 = vmatpush1.msra.mxu0 %v1556
    %1611 = vmatprep.subr.mxu0 0.0
    %1612 = vmatpush1.msra.mxu0 %v1557
    %1613 = vmatprep.subr.mxu0 0.0
    %1614 = vmatpush1.msra.mxu0 %v1558
    %1615 = vmatprep.subr.mxu0 0.0
    %1616 = vmatpush1.msra.mxu0 %v1559
    %1617 = vmatprep.subr.mxu0 0.0
    %1618 = vmatpush1.msra.mxu0 %v1560
    %1619 = vmatprep.subr.mxu0 0.0
    %1620 = vmatpush1.msra.mxu0 %v1561
    %1621 = vmatprep.subr.mxu0 0.0
    %1622 = vmatpush1.msra.mxu0 %v1562
    %1623 = vmatprep.subr.mxu0 0.0
    %1624 = vmatpush1.msra.mxu0 %v1563
    %1625 = vmatprep.subr.mxu0 0.0
    %1626 = vmatpush1.msra.mxu0 %v1564
    %1627 = vmatprep.subr.mxu0 0.0
    %1628 = vmatpush1.msra.mxu0 %v1565
    %1629 = vmatprep.subr.mxu0 0.0
    %1630 = vmatpush1.msra.mxu0 %v1566
    %1631 = vmatprep.subr.mxu0 0.0
    %1632 = vmatpush1.msra.mxu0 %v1567
    %1633 = vmatprep.subr.mxu0 0.0
    %1634 = vmatpush1.msra.mxu0 %v1568
    %1635 = vmatprep.subr.mxu0 0.0
    %1636 = vmatpush1.msra.mxu0 %v1569
    %1637 = vmatprep.subr.mxu0 0.0
    %1638 = vmatpush1.msra.mxu0 %v1570
    %1639 = vmatprep.mubr.f32.mxu0 %v1572
    %1640 = vmatmul.mubr.f32.gmra.mrb[0].mxu0 %v1571
    %v1641 = vpop.f32.mrb[0].mxu0
    %v1642 = vadd.f32 0.0, %v1641
    %v1643 = vpop.f32.mrb[0].mxu0
    %1644 = vdwg.mxu0
    %v1645 = vadd.f32 %v1538, %v1642
    %v1646 = vld [vmem:[%s787] sm:$0xff]
    %v1647 = vld [vmem:[%s787 + $0x8] sm:$0xff]
    %v1648 = vld [vmem:[%s787 + $0x10] sm:$0xff]
    %v1649 = vld [vmem:[%s787 + $0x18] sm:$0xff]
    %v1650 = vld [vmem:[%s787 + $0x20] sm:$0xff]
    %v1651 = vld [vmem:[%s787 + $0x28] sm:$0xff]
    %v1652 = vld [vmem:[%s787 + $0x30] sm:$0xff]
    %v1653 = vld [vmem:[%s787 + $0x38] sm:$0xff]
    %v1654 = vld [vmem:[%s787 + $0x40] sm:$0xff]
    %v1655 = vld [vmem:[%s787 + $0x48] sm:$0xff]
    %v1656 = vld [vmem:[%s787 + $0x50] sm:$0xff]
    %v1657 = vld [vmem:[%s787 + $0x58] sm:$0xff]
    %v1658 = vld [vmem:[%s787 + $0x60] sm:$0xff]
    %v1659 = vld [vmem:[%s787 + $0x68] sm:$0xff]
    %v1660 = vld [vmem:[%s787 + $0x70] sm:$0xff]
    %v1661 = vld [vmem:[%s787 + $0x78] sm:$0xff]
    %v1662 = vld [vmem:[%s787 + $0x80] sm:$0xff]
    %v1663 = vld [vmem:[%s787 + $0x88] sm:$0xff]
    %v1664 = vld [vmem:[%s787 + $0x90] sm:$0xff]
    %v1665 = vld [vmem:[%s787 + $0x98] sm:$0xff]
    %v1666 = vld [vmem:[%s787 + $0xa0] sm:$0xff]
    %v1667 = vld [vmem:[%s787 + $0xa8] sm:$0xff]
    %v1668 = vld [vmem:[%s787 + $0xb0] sm:$0xff]
    %v1669 = vld [vmem:[%s787 + $0xb8] sm:$0xff]
    %v1670 = vld [vmem:[%s787 + $0xc0] sm:$0xff]
    %v1671 = vld [vmem:[%s787 + $0xc8] sm:$0xff]
    %v1672 = vld [vmem:[%s787 + $0xd0] sm:$0xff]
    %v1673 = vld [vmem:[%s787 + $0xd8] sm:$0xff]
    %v1674 = vld [vmem:[%s787 + $0xe0] sm:$0xff]
    %v1675 = vld [vmem:[%s787 + $0xe8] sm:$0xff]
    %v1676 = vld [vmem:[%s787 + $0xf0] sm:$0xff]
    %v1677 = vld [vmem:[%s787 + $0xf8] sm:$0xff]
    %v1678 = vrot.slane %v250, 5
    %v1679 = vrot.slane %v251, 5
    %1682 = vmatprep.subr.mxu0 0.0
    %1683 = vmatpush1.msra.mxu0 %v1646
    %1684 = vmatprep.subr.mxu0 0.0
    %1685 = vmatpush1.msra.mxu0 %v1647
    %1686 = vmatprep.subr.mxu0 0.0
    %1687 = vmatpush1.msra.mxu0 %v1648
    %1688 = vmatprep.subr.mxu0 0.0
    %1689 = vmatpush1.msra.mxu0 %v1649
    %1690 = vmatprep.subr.mxu0 0.0
    %1691 = vmatpush1.msra.mxu0 %v1650
    %1692 = vmatprep.subr.mxu0 0.0
    %1693 = vmatpush1.msra.mxu0 %v1651
    %1694 = vmatprep.subr.mxu0 0.0
    %1695 = vmatpush1.msra.mxu0 %v1652
    %1696 = vmatprep.subr.mxu0 0.0
    %1697 = vmatpush1.msra.mxu0 %v1653
    %1698 = vmatprep.subr.mxu0 0.0
    %1699 = vmatpush1.msra.mxu0 %v1654
    %1700 = vmatprep.subr.mxu0 0.0
    %1701 = vmatpush1.msra.mxu0 %v1655
    %1702 = vmatprep.subr.mxu0 0.0
    %1703 = vmatpush1.msra.mxu0 %v1656
    %1704 = vmatprep.subr.mxu0 0.0
    %1705 = vmatpush1.msra.mxu0 %v1657
    %1706 = vmatprep.subr.mxu0 0.0
    %1707 = vmatpush1.msra.mxu0 %v1658
    %1708 = vmatprep.subr.mxu0 0.0
    %1709 = vmatpush1.msra.mxu0 %v1659
    %1710 = vmatprep.subr.mxu0 0.0
    %1711 = vmatpush1.msra.mxu0 %v1660
    %1712 = vmatprep.subr.mxu0 0.0
    %1713 = vmatpush1.msra.mxu0 %v1661
    %1714 = vmatprep.subr.mxu0 0.0
    %1715 = vmatpush1.msra.mxu0 %v1662
    %1716 = vmatprep.subr.mxu0 0.0
    %1717 = vmatpush1.msra.mxu0 %v1663
    %1718 = vmatprep.subr.mxu0 0.0
    %1719 = vmatpush1.msra.mxu0 %v1664
    %1720 = vmatprep.subr.mxu0 0.0
    %1721 = vmatpush1.msra.mxu0 %v1665
    %1722 = vmatprep.subr.mxu0 0.0
    %1723 = vmatpush1.msra.mxu0 %v1666
    %1724 = vmatprep.subr.mxu0 0.0
    %1725 = vmatpush1.msra.mxu0 %v1667
    %1726 = vmatprep.subr.mxu0 0.0
    %1727 = vmatpush1.msra.mxu0 %v1668
    %1728 = vmatprep.subr.mxu0 0.0
    %1729 = vmatpush1.msra.mxu0 %v1669
    %1730 = vmatprep.subr.mxu0 0.0
    %1731 = vmatpush1.msra.mxu0 %v1670
    %1732 = vmatprep.subr.mxu0 0.0
    %1733 = vmatpush1.msra.mxu0 %v1671
    %1734 = vmatprep.subr.mxu0 0.0
    %1735 = vmatpush1.msra.mxu0 %v1672
    %1736 = vmatprep.subr.mxu0 0.0
    %1737 = vmatpush1.msra.mxu0 %v1673
    %1738 = vmatprep.subr.mxu0 0.0
    %1739 = vmatpush1.msra.mxu0 %v1674
    %1740 = vmatprep.subr.mxu0 0.0
    %1741 = vmatpush1.msra.mxu0 %v1675
    %1742 = vmatprep.subr.mxu0 0.0
    %1743 = vmatpush1.msra.mxu0 %v1676
    %1744 = vmatprep.subr.mxu0 0.0
    %1745 = vmatpush1.msra.mxu0 %v1677
    %1746 = vmatprep.mubr.f32.mxu0 %v1679
    %1747 = vmatmul.mubr.f32.gmra.mrb[0].mxu0 %v1678
    %v1748 = vpop.f32.mrb[0].mxu0
    %v1749 = vadd.f32 0.0, %v1748
    %v1750 = vpop.f32.mrb[0].mxu0
    %1751 = vdwg.mxu0
    %v1752 = vadd.f32 %v1645, %v1749
    %v1753 = vld [vmem:[%s895] sm:$0xff]
    %v1754 = vld [vmem:[%s895 + $0x8] sm:$0xff]
    %v1755 = vld [vmem:[%s895 + $0x10] sm:$0xff]
    %v1756 = vld [vmem:[%s895 + $0x18] sm:$0xff]
    %v1757 = vld [vmem:[%s895 + $0x20] sm:$0xff]
    %v1758 = vld [vmem:[%s895 + $0x28] sm:$0xff]
    %v1759 = vld [vmem:[%s895 + $0x30] sm:$0xff]
    %v1760 = vld [vmem:[%s895 + $0x38] sm:$0xff]
    %v1761 = vld [vmem:[%s895 + $0x40] sm:$0xff]
    %v1762 = vld [vmem:[%s895 + $0x48] sm:$0xff]
    %v1763 = vld [vmem:[%s895 + $0x50] sm:$0xff]
    %v1764 = vld [vmem:[%s895 + $0x58] sm:$0xff]
    %v1765 = vld [vmem:[%s895 + $0x60] sm:$0xff]
    %v1766 = vld [vmem:[%s895 + $0x68] sm:$0xff]
    %v1767 = vld [vmem:[%s895 + $0x70] sm:$0xff]
    %v1768 = vld [vmem:[%s895 + $0x78] sm:$0xff]
    %v1769 = vld [vmem:[%s895 + $0x80] sm:$0xff]
    %v1770 = vld [vmem:[%s895 + $0x88] sm:$0xff]
    %v1771 = vld [vmem:[%s895 + $0x90] sm:$0xff]
    %v1772 = vld [vmem:[%s895 + $0x98] sm:$0xff]
    %v1773 = vld [vmem:[%s895 + $0xa0] sm:$0xff]
    %v1774 = vld [vmem:[%s895 + $0xa8] sm:$0xff]
    %v1775 = vld [vmem:[%s895 + $0xb0] sm:$0xff]
    %v1776 = vld [vmem:[%s895 + $0xb8] sm:$0xff]
    %v1777 = vld [vmem:[%s895 + $0xc0] sm:$0xff]
    %v1778 = vld [vmem:[%s895 + $0xc8] sm:$0xff]
    %v1779 = vld [vmem:[%s895 + $0xd0] sm:$0xff]
    %v1780 = vld [vmem:[%s895 + $0xd8] sm:$0xff]
    %v1781 = vld [vmem:[%s895 + $0xe0] sm:$0xff]
    %v1782 = vld [vmem:[%s895 + $0xe8] sm:$0xff]
    %v1783 = vld [vmem:[%s895 + $0xf0] sm:$0xff]
    %v1784 = vld [vmem:[%s895 + $0xf8] sm:$0xff]
    %v1785 = vrot.slane %v250, 6
    %v1786 = vrot.slane %v251, 6
    %1789 = vmatprep.subr.mxu0 0.0
    %1790 = vmatpush1.msra.mxu0 %v1753
    %1791 = vmatprep.subr.mxu0 0.0
    %1792 = vmatpush1.msra.mxu0 %v1754
    %1793 = vmatprep.subr.mxu0 0.0
    %1794 = vmatpush1.msra.mxu0 %v1755
    %1795 = vmatprep.subr.mxu0 0.0
    %1796 = vmatpush1.msra.mxu0 %v1756
    %1797 = vmatprep.subr.mxu0 0.0
    %1798 = vmatpush1.msra.mxu0 %v1757
    %1799 = vmatprep.subr.mxu0 0.0
    %1800 = vmatpush1.msra.mxu0 %v1758
    %1801 = vmatprep.subr.mxu0 0.0
    %1802 = vmatpush1.msra.mxu0 %v1759
    %1803 = vmatprep.subr.mxu0 0.0
    %1804 = vmatpush1.msra.mxu0 %v1760
    %1805 = vmatprep.subr.mxu0 0.0
    %1806 = vmatpush1.msra.mxu0 %v1761
    %1807 = vmatprep.subr.mxu0 0.0
    %1808 = vmatpush1.msra.mxu0 %v1762
    %1809 = vmatprep.subr.mxu0 0.0
    %1810 = vmatpush1.msra.mxu0 %v1763
    %1811 = vmatprep.subr.mxu0 0.0
    %1812 = vmatpush1.msra.mxu0 %v1764
    %1813 = vmatprep.subr.mxu0 0.0
    %1814 = vmatpush1.msra.mxu0 %v1765
    %1815 = vmatprep.subr.mxu0 0.0
    %1816 = vmatpush1.msra.mxu0 %v1766
    %1817 = vmatprep.subr.mxu0 0.0
    %1818 = vmatpush1.msra.mxu0 %v1767
    %1819 = vmatprep.subr.mxu0 0.0
    %1820 = vmatpush1.msra.mxu0 %v1768
    %1821 = vmatprep.subr.mxu0 0.0
    %1822 = vmatpush1.msra.mxu0 %v1769
    %1823 = vmatprep.subr.mxu0 0.0
    %1824 = vmatpush1.msra.mxu0 %v1770
    %1825 = vmatprep.subr.mxu0 0.0
    %1826 = vmatpush1.msra.mxu0 %v1771
    %1827 = vmatprep.subr.mxu0 0.0
    %1828 = vmatpush1.msra.mxu0 %v1772
    %1829 = vmatprep.subr.mxu0 0.0
    %1830 = vmatpush1.msra.mxu0 %v1773
    %1831 = vmatprep.subr.mxu0 0.0
    %1832 = vmatpush1.msra.mxu0 %v1774
    %1833 = vmatprep.subr.mxu0 0.0
    %1834 = vmatpush1.msra.mxu0 %v1775
    %1835 = vmatprep.subr.mxu0 0.0
    %1836 = vmatpush1.msra.mxu0 %v1776
    %1837 = vmatprep.subr.mxu0 0.0
    %1838 = vmatpush1.msra.mxu0 %v1777
    %1839 = vmatprep.subr.mxu0 0.0
    %1840 = vmatpush1.msra.mxu0 %v1778
    %1841 = vmatprep.subr.mxu0 0.0
    %1842 = vmatpush1.msra.mxu0 %v1779
    %1843 = vmatprep.subr.mxu0 0.0
    %1844 = vmatpush1.msra.mxu0 %v1780
    %1845 = vmatprep.subr.mxu0 0.0
    %1846 = vmatpush1.msra.mxu0 %v1781
    %1847 = vmatprep.subr.mxu0 0.0
    %1848 = vmatpush1.msra.mxu0 %v1782
    %1849 = vmatprep.subr.mxu0 0.0
    %1850 = vmatpush1.msra.mxu0 %v1783
    %1851 = vmatprep.subr.mxu0 0.0
    %1852 = vmatpush1.msra.mxu0 %v1784
    %1853 = vmatprep.mubr.f32.mxu0 %v1786
    %1854 = vmatmul.mubr.f32.gmra.mrb[0].mxu0 %v1785
    %v1855 = vpop.f32.mrb[0].mxu0
    %v1856 = vadd.f32 0.0, %v1855
    %v1857 = vpop.f32.mrb[0].mxu0
    %1858 = vdwg.mxu0
    %v1859 = vadd.f32 %v1752, %v1856
    %v1860 = vld [vmem:[%s1003] sm:$0xff]
    %v1861 = vld [vmem:[%s1003 + $0x8] sm:$0xff]
    %v1862 = vld [vmem:[%s1003 + $0x10] sm:$0xff]
    %v1863 = vld [vmem:[%s1003 + $0x18] sm:$0xff]
    %v1864 = vld [vmem:[%s1003 + $0x20] sm:$0xff]
    %v1865 = vld [vmem:[%s1003 + $0x28] sm:$0xff]
    %v1866 = vld [vmem:[%s1003 + $0x30] sm:$0xff]
    %v1867 = vld [vmem:[%s1003 + $0x38] sm:$0xff]
    %v1868 = vld [vmem:[%s1003 + $0x40] sm:$0xff]
    %v1869 = vld [vmem:[%s1003 + $0x48] sm:$0xff]
    %v1870 = vld [vmem:[%s1003 + $0x50] sm:$0xff]
    %v1871 = vld [vmem:[%s1003 + $0x58] sm:$0xff]
    %v1872 = vld [vmem:[%s1003 + $0x60] sm:$0xff]
    %v1873 = vld [vmem:[%s1003 + $0x68] sm:$0xff]
    %v1874 = vld [vmem:[%s1003 + $0x70] sm:$0xff]
    %v1875 = vld [vmem:[%s1003 + $0x78] sm:$0xff]
    %v1876 = vld [vmem:[%s1003 + $0x80] sm:$0xff]
    %v1877 = vld [vmem:[%s1003 + $0x88] sm:$0xff]
    %v1878 = vld [vmem:[%s1003 + $0x90] sm:$0xff]
    %v1879 = vld [vmem:[%s1003 + $0x98] sm:$0xff]
    %v1880 = vld [vmem:[%s1003 + $0xa0] sm:$0xff]
    %v1881 = vld [vmem:[%s1003 + $0xa8] sm:$0xff]
    %v1882 = vld [vmem:[%s1003 + $0xb0] sm:$0xff]
    %v1883 = vld [vmem:[%s1003 + $0xb8] sm:$0xff]
    %v1884 = vld [vmem:[%s1003 + $0xc0] sm:$0xff]
    %v1885 = vld [vmem:[%s1003 + $0xc8] sm:$0xff]
    %v1886 = vld [vmem:[%s1003 + $0xd0] sm:$0xff]
    %v1887 = vld [vmem:[%s1003 + $0xd8] sm:$0xff]
    %v1888 = vld [vmem:[%s1003 + $0xe0] sm:$0xff]
    %v1889 = vld [vmem:[%s1003 + $0xe8] sm:$0xff]
    %v1890 = vld [vmem:[%s1003 + $0xf0] sm:$0xff]
    %v1891 = vld [vmem:[%s1003 + $0xf8] sm:$0xff]
    %v1892 = vrot.slane %v250, 7
    %v1893 = vrot.slane %v251, 7
    %1896 = vmatprep.subr.mxu0 0.0
    %1897 = vmatpush1.msra.mxu0 %v1860
    %1898 = vmatprep.subr.mxu0 0.0
    %1899 = vmatpush1.msra.mxu0 %v1861
    %1900 = vmatprep.subr.mxu0 0.0
    %1901 = vmatpush1.msra.mxu0 %v1862
    %1902 = vmatprep.subr.mxu0 0.0
    %1903 = vmatpush1.msra.mxu0 %v1863
    %1904 = vmatprep.subr.mxu0 0.0
    %1905 = vmatpush1.msra.mxu0 %v1864
    %1906 = vmatprep.subr.mxu0 0.0
    %1907 = vmatpush1.msra.mxu0 %v1865
    %1908 = vmatprep.subr.mxu0 0.0
    %1909 = vmatpush1.msra.mxu0 %v1866
    %1910 = vmatprep.subr.mxu0 0.0
    %1911 = vmatpush1.msra.mxu0 %v1867
    %1912 = vmatprep.subr.mxu0 0.0
    %1913 = vmatpush1.msra.mxu0 %v1868
    %1914 = vmatprep.subr.mxu0 0.0
    %1915 = vmatpush1.msra.mxu0 %v1869
    %1916 = vmatprep.subr.mxu0 0.0
    %1917 = vmatpush1.msra.mxu0 %v1870
    %1918 = vmatprep.subr.mxu0 0.0
    %1919 = vmatpush1.msra.mxu0 %v1871
    %1920 = vmatprep.subr.mxu0 0.0
    %1921 = vmatpush1.msra.mxu0 %v1872
    %1922 = vmatprep.subr.mxu0 0.0
    %1923 = vmatpush1.msra.mxu0 %v1873
    %1924 = vmatprep.subr.mxu0 0.0
    %1925 = vmatpush1.msra.mxu0 %v1874
    %1926 = vmatprep.subr.mxu0 0.0
    %1927 = vmatpush1.msra.mxu0 %v1875
    %1928 = vmatprep.subr.mxu0 0.0
    %1929 = vmatpush1.msra.mxu0 %v1876
    %1930 = vmatprep.subr.mxu0 0.0
    %1931 = vmatpush1.msra.mxu0 %v1877
    %1932 = vmatprep.subr.mxu0 0.0
    %1933 = vmatpush1.msra.mxu0 %v1878
    %1934 = vmatprep.subr.mxu0 0.0
    %1935 = vmatpush1.msra.mxu0 %v1879
    %1936 = vmatprep.subr.mxu0 0.0
    %1937 = vmatpush1.msra.mxu0 %v1880
    %1938 = vmatprep.subr.mxu0 0.0
    %1939 = vmatpush1.msra.mxu0 %v1881
    %1940 = vmatprep.subr.mxu0 0.0
    %1941 = vmatpush1.msra.mxu0 %v1882
    %1942 = vmatprep.subr.mxu0 0.0
    %1943 = vmatpush1.msra.mxu0 %v1883
    %1944 = vmatprep.subr.mxu0 0.0
    %1945 = vmatpush1.msra.mxu0 %v1884
    %1946 = vmatprep.subr.mxu0 0.0
    %1947 = vmatpush1.msra.mxu0 %v1885
    %1948 = vmatprep.subr.mxu0 0.0
    %1949 = vmatpush1.msra.mxu0 %v1886
    %1950 = vmatprep.subr.mxu0 0.0
    %1951 = vmatpush1.msra.mxu0 %v1887
    %1952 = vmatprep.subr.mxu0 0.0
    %1953 = vmatpush1.msra.mxu0 %v1888
    %1954 = vmatprep.subr.mxu0 0.0
    %1955 = vmatpush1.msra.mxu0 %v1889
    %1956 = vmatprep.subr.mxu0 0.0
    %1957 = vmatpush1.msra.mxu0 %v1890
    %1958 = vmatprep.subr.mxu0 0.0
    %1959 = vmatpush1.msra.mxu0 %v1891
    %1960 = vmatprep.mubr.f32.mxu0 %v1893
    %1961 = vmatmul.mubr.f32.gmra.mrb[0].mxu0 %v1892
    %v1962 = vpop.f32.mrb[0].mxu0
    %v1963 = vadd.f32 0.0, %v1962
    %v1964 = vpop.f32.mrb[0].mxu0
    %1965 = vdwg.mxu0
    %v1966 = vadd.f32 %v1859, %v1963
    %v1967 = vld [vmem:[%s5] sm:$0x1]
    %v1968 = vadd.f32 %v1966, %v1967
    %1969 = vst.msk [vmem:[#allocation2 + $0x1] sm:$0x1] %vm1113, %v1968
    // Predicated region
    $region26: #{tpu_custom_call.1} parent=1 // pred_check
      _
    $region27: #{tpu_custom_call.1} parent=1 // pred_check_branch
      %1971 = sbr.rel (0) target = $region29
    $region28: #{tpu_custom_call.1} parent=1 // pred_region
      %s1973 = ssub.s32 32, 32
      %1974 = vsyncadd [#allocation3], %s1973
      %s1976 = sshll.u32 [#allocation2], 4
      %s1977 = int_to_ptr.vmem [resolvable:$true] %s1976
      %1979 = dma.vmem_to_hbm [thread:$0]  %s1977, 32, %s6, [#allocation3]
    $region29: #{tpu_custom_call.1} parent=1 // pred_fallthru
      _
    // Predicated region
    $region30: #{tpu_custom_call.1} parent=1 // pred_check
      _
    $region31: #{tpu_custom_call.1} parent=1 // pred_check_branch
      %1981 = sbr.rel (0) target = $region33
    $region32: #{tpu_custom_call.1} parent=1 // pred_region
      %1982 = dma.done [#allocation3], 32
    $region33: #{tpu_custom_call.1} parent=1 // pred_fallthru
      _
    %1983 = vsyncpa [#allocation3], 1

</llo_original>
